<compile_context>
chip_gen: v7x
topology: tpu7x:2x2x1
jax: 0.10.0
libtpu: 0.0.40
codegen_flags: <defaults>
</compile_context>

<pallas_src>
import functools

import jax
import jax.numpy as jnp
from jax.experimental import pallas as pl
from jax.experimental.pallas import tpu as pltpu


def _attention_kernel(x_ref, wqkv_ref, bqkv_ref, wo_ref, bo_ref, o_ref,
                      *, n_heads: int, d_k: int, use_bf16: bool):
    # x_ref block: (Tb, S, C); weights already reordered as [Q|K|V] (heads contiguous
    # inside each group) with the 1/sqrt(dk) scale folded into the Q columns/bias.
    Tb, S, C = x_ref.shape
    hd = n_heads * d_k
    mm_dtype = jnp.bfloat16 if use_bf16 else jnp.float32

    x = x_ref[...].astype(jnp.float32)                      # (Tb, S, C)
    x2 = x.reshape(Tb * S, C)                               # (M, C), M = Tb*S

    # QKV projection for the whole batch tile in one matmul.
    qkv = jnp.dot(x2.astype(mm_dtype), wqkv_ref[...].astype(mm_dtype),
                  preferred_element_type=jnp.float32)
    qkv = qkv + bqkv_ref[...]                               # (M, 3*hd)

    wo = wo_ref[...].astype(mm_dtype)                       # (hd, C)

    # Output-proj bias + inner residual (x) + outer residual (x) fused: bo + 2*x.
    acc = bo_ref[...] + 2.0 * x2                            # (M, C)

    for h in range(n_heads):
        q = qkv[:, h * d_k:(h + 1) * d_k].reshape(Tb, S, d_k)
        k = qkv[:, hd + h * d_k: hd + (h + 1) * d_k].reshape(Tb, S, d_k)
        v = qkv[:, 2 * hd + h * d_k: 2 * hd + (h + 1) * d_k].reshape(Tb, S, d_k)

        # Scores (scale already folded into q via the weights).
        s = jnp.einsum('tsd,tzd->tsz', q.astype(mm_dtype), k.astype(mm_dtype),
                       preferred_element_type=jnp.float32)  # (Tb, S, S)
        s = s - jnp.max(s, axis=-1, keepdims=True)
        p = jnp.exp(s)
        p = p * pl.reciprocal(jnp.sum(p, axis=-1, keepdims=True), approx=True)

        oh = jnp.einsum('tsz,tzd->tsd', p.astype(mm_dtype), v.astype(mm_dtype),
                        preferred_element_type=jnp.float32)  # (Tb, S, dk)

        # Per-head output projection accumulated directly (no concatenate).
        acc = acc + jnp.dot(oh.reshape(Tb * S, d_k).astype(mm_dtype),
                            wo[h * d_k:(h + 1) * d_k, :],
                            preferred_element_type=jnp.float32)

    o_ref[...] = acc.reshape(Tb, S, C).astype(o_ref.dtype)


def _pick_batch_tile(bs, S, C, n_heads, d_k, *, cap=16, vmem_budget=8 << 20):
    """Largest divisor of bs within a VMEM-derived cap, keeping >=2 grid steps."""
    per_elem = 4 * (4 * S * C + 3 * n_heads * d_k * S + 2 * S * S + 2 * S * d_k)
    cap = int(max(1, min(cap, vmem_budget // max(per_elem, 1))))
    if bs >= 2:
        cap = min(cap, bs // 2)   # keep >= 2 grid steps for megacore / v7x dual-TC
    tb = 1
    for d in range(1, min(cap, bs) + 1):
        if bs % d == 0:
            tb = d
    return tb


def spatial_attention_pallas(x, t, wqkv, bqkv, wo, bo, *, n_heads: int, d_k: int,
                             use_bf16_matmul: bool = False, block_batch: int | None = None):
    """x: (B, C, T, H, W); t: (B, D) unused (signature parity). Returns (B, C, T, H, W)."""
    del t  # the reference forward ignores t
    B, C, T, H, W = x.shape
    S = H * W
    bs = B * T
    hd = n_heads * d_k
    scale = d_k ** (-0.5)

    # --- trace-time weight restructuring (free at runtime) ---------------------------
    # Original feature order per the PyTorch view: (head, [q|k|v], dk).
    # Reorder to ([q|k|v], head, dk) and fold the softmax scale into the Q columns/bias.
    qkv_scale = jnp.array([scale, 1.0, 1.0], dtype=wqkv.dtype)
    w4 = wqkv.reshape(C, n_heads, 3, d_k) * qkv_scale[None, None, :, None]
    b3 = bqkv.reshape(n_heads, 3, d_k) * qkv_scale[None, :, None]
    wqkv_r = jnp.transpose(w4, (0, 2, 1, 3)).reshape(C, 3 * hd)
    bqkv_r = jnp.transpose(b3, (1, 0, 2)).reshape(1, 3 * hd)
    bo_r = bo.reshape(1, C)

    # (B, C, T, H, W) -> (bs, S, C)   (single transpose pass; inverse applied on output)
    x_seq = jnp.transpose(x, (0, 2, 3, 4, 1)).reshape(bs, S, C)

    tb = block_batch if block_batch is not None else _pick_batch_tile(bs, S, C, n_heads, d_k)
    assert bs % tb == 0, "block_batch must divide B*T"

    flops = bs * (2 * S * C * 3 * hd + n_heads * 4 * S * S * d_k + 2 * S * hd * C)
    transc = bs * n_heads * (S * S + S)
    bytes_acc = 2 * bs * S * C * 4 + (C * 3 * hd + 3 * hd + hd * C + C) * 4

    kernel = functools.partial(_attention_kernel, n_heads=n_heads, d_k=d_k,
                               use_bf16=use_bf16_matmul)

    out_seq = pl.pallas_call(
        kernel,
        out_shape=jax.ShapeDtypeStruct((bs, S, C), x.dtype),
        grid_spec=pltpu.PrefetchScalarGridSpec(
            num_scalar_prefetch=0,
            grid=(bs // tb,),
            in_specs=[
                pl.BlockSpec((tb, S, C), lambda i: (i, 0, 0)),        # x_seq
                pl.BlockSpec((C, 3 * hd), lambda i: (0, 0)),          # Wqkv (reordered, scaled)
                pl.BlockSpec((1, 3 * hd), lambda i: (0, 0)),          # bqkv
                pl.BlockSpec((hd, C), lambda i: (0, 0)),              # Wo
                pl.BlockSpec((1, C), lambda i: (0, 0)),               # bo
            ],
            out_specs=pl.BlockSpec((tb, S, C), lambda i: (i, 0, 0)),
        ),
        compiler_params=pltpu.CompilerParams(
            dimension_semantics=("parallel",),
            vmem_limit_bytes=32 * 1024 * 1024,
        ),
        cost_estimate=pl.CostEstimate(flops=int(flops),
                                      transcendentals=int(transc),
                                      bytes_accessed=int(bytes_acc)),
    )(x_seq, wqkv_r, bqkv_r, wo, bo_r)

    # Both residuals were added in-kernel; only the layout restore remains.
    return jnp.transpose(out_seq.reshape(B, T, H, W, C), (0, 4, 1, 2, 3))


def _reference_jax(x, wqkv, bqkv, wo, bo, *, n_heads, d_k):
    """Pure-JAX reference mirroring the PyTorch code, for validation."""
    B, C, T, H, W = x.shape
    S = H * W
    h_res = x
    xs = jnp.transpose(x, (0, 2, 1, 3, 4)).reshape(B * T, C, S)
    xs = jnp.transpose(xs, (0, 2, 1))                                  # (bs, S, C)
    qkv = xs @ wqkv + bqkv                                             # (bs, S, nH*3*dk)
    qkv = qkv.reshape(B * T, S, n_heads, 3 * d_k)
    q, k, v = jnp.split(qkv, 3, axis=-1)
    attn = jnp.einsum('bihd,bjhd->bijh', q, k) * (d_k ** -0.5)
    attn = jax.nn.softmax(attn, axis=2)
    res = jnp.einsum('bijh,bjhd->bihd', attn, v).reshape(B * T, S, n_heads * d_k)
    res = res @ wo + bo + xs
    res = jnp.transpose(res, (0, 2, 1)).reshape(B, T, C, H, W)
    res = jnp.transpose(res, (0, 2, 1, 3, 4))
    return res + h_res


if __name__ == "__main__":
    # Small shapes consistent with the module (C divisible by n_groups=8 for GroupNorm init).
    B, C, T, H, W = 2, 8, 2, 8, 8
    n_heads = 2
    d_k = C          # PyTorch default: d_k = n_channels when d_k is None
    D_t = 16         # time-embedding dim; `t` is unused by the forward pass

    key = jax.random.PRNGKey(0)
    kx, kt, k1, k2, k3, k4 = jax.random.split(key, 6)

    x = jax.random.normal(kx, (B, C, T, H, W), dtype=jnp.float32)
    t = jax.random.normal(kt, (B, D_t), dtype=jnp.float32)

    # PyTorch Linear stores weight (out, in); we store the transposed (in, out) layout.
    lim_qkv = 1.0 / (C ** 0.5)
    wqkv = jax.random.uniform(k1, (C, n_heads * 3 * d_k), jnp.float32, -lim_qkv, lim_qkv)
    bqkv = jax.random.uniform(k2, (1, n_heads * 3 * d_k), jnp.float32, -lim_qkv, lim_qkv)
    lim_o = 1.0 / ((n_heads * d_k) ** 0.5)
    wo = jax.random.uniform(k3, (n_heads * d_k, C), jnp.float32, -lim_o, lim_o)
    bo = jax.random.uniform(k4, (1, C), jnp.float32, -lim_o, lim_o)

    out = spatial_attention_pallas(x, t, wqkv, bqkv, wo, bo, n_heads=n_heads, d_k=d_k)
    out = jax.block_until_ready(out)

    ref = _reference_jax(x, wqkv, bqkv, wo, bo, n_heads=n_heads, d_k=d_k)
    assert out.shape == (B, C, T, H, W)
    # Tolerance loosened slightly vs exact f32 because softmax uses the EUP approximate
    # reciprocal (pl.reciprocal(..., approx=True)).
    assert jnp.max(jnp.abs(out - ref)) < 5e-3

    print("KERNEL_OK")
</pallas_src>

<mosaic_0001>
module attributes {stable_mosaic.version = 11 : i64} {
  func.func @_attention_kernel(%arg0: i32, %arg1: memref<2x64x8xf32, #tpu.memory_space<vmem>>, %arg2: memref<8x48xf32, #tpu.memory_space<vmem>>, %arg3: memref<1x48xf32, #tpu.memory_space<vmem>>, %arg4: memref<16x8xf32, #tpu.memory_space<vmem>>, %arg5: memref<1x8xf32, #tpu.memory_space<vmem>>, %arg6: memref<2x64x8xf32, #tpu.memory_space<vmem>>) attributes {dimension_semantics = [#tpu.dimension_semantics<parallel>], iteration_bounds = array<i64: 2>, scalar_prefetch = 0 : i64, scratch_operands = 0 : i64, tpu.core_type = #tpu.core_type<tc>, window_params = [{transform_indices = @transform_0, window_bounds = array<i64: 2, 64, 8>}, {pipeline_mode = #tpu.pipeline_mode<synchronous>, transform_indices = @transform_1, window_bounds = array<i64: 8, 48>}, {pipeline_mode = #tpu.pipeline_mode<synchronous>, transform_indices = @transform_2, window_bounds = array<i64: 1, 48>}, {pipeline_mode = #tpu.pipeline_mode<synchronous>, transform_indices = @transform_3, window_bounds = array<i64: 16, 8>}, {pipeline_mode = #tpu.pipeline_mode<synchronous>, transform_indices = @transform_4, window_bounds = array<i64: 1, 8>}, {transform_indices = @transform_5, window_bounds = array<i64: 2, 64, 8>}]} {
    %c0 = arith.constant 0 : index
    %c0_0 = arith.constant 0 : index
    %c0_1 = arith.constant 0 : index
    %0 = vector.load %arg1[%c0, %c0_0, %c0_1] : memref<2x64x8xf32, #tpu.memory_space<vmem>>, vector<2x64x8xf32>
    %1 = vector.shape_cast %0 : vector<2x64x8xf32> to vector<128x8xf32>
    %c0_2 = arith.constant 0 : index
    %c0_3 = arith.constant 0 : index
    %2 = vector.load %arg2[%c0_2, %c0_3] : memref<8x48xf32, #tpu.memory_space<vmem>>, vector<8x48xf32>
    %cst = arith.constant dense<0.000000e+00> : vector<128x48xf32>
    %3 = tpu.matmul %1, %2, %cst {dimension_numbers = #tpu.dot_dimension_numbers<[1], [0], [0], [1], [0, 0, 1, 1], [], []>} : vector<128x8xf32>, vector<8x48xf32>, vector<128x48xf32> -> vector<128x48xf32>
    %c0_4 = arith.constant 0 : index
    %c0_5 = arith.constant 0 : index
    %4 = vector.load %arg3[%c0_4, %c0_5] : memref<1x48xf32, #tpu.memory_space<vmem>>, vector<1x48xf32>
    %5 = vector.broadcast %4 : vector<1x48xf32> to vector<128x48xf32>
    %6 = arith.addf %3, %5 : vector<128x48xf32>
    %c0_6 = arith.constant 0 : index
    %c0_7 = arith.constant 0 : index
    %7 = vector.load %arg4[%c0_6, %c0_7] : memref<16x8xf32, #tpu.memory_space<vmem>>, vector<16x8xf32>
    %c0_8 = arith.constant 0 : index
    %c0_9 = arith.constant 0 : index
    %8 = vector.load %arg5[%c0_8, %c0_9] : memref<1x8xf32, #tpu.memory_space<vmem>>, vector<1x8xf32>
    %cst_10 = arith.constant 2.000000e+00 : f32
    %9 = vector.broadcast %cst_10 : f32 to vector<128x8xf32>
    %10 = arith.mulf %9, %1 : vector<128x8xf32>
    %11 = vector.broadcast %8 : vector<1x8xf32> to vector<128x8xf32>
    %12 = arith.addf %11, %10 : vector<128x8xf32>
    %13 = vector.extract_strided_slice %6 {offsets = [0, 0], sizes = [128, 8], strides = [1, 1]} : vector<128x48xf32> to vector<128x8xf32>
    %14 = vector.shape_cast %13 : vector<128x8xf32> to vector<2x64x8xf32>
    %15 = vector.extract_strided_slice %6 {offsets = [0, 16], sizes = [128, 8], strides = [1, 1]} : vector<128x48xf32> to vector<128x8xf32>
    %16 = vector.shape_cast %15 : vector<128x8xf32> to vector<2x64x8xf32>
    %17 = vector.extract_strided_slice %6 {offsets = [0, 32], sizes = [128, 8], strides = [1, 1]} : vector<128x48xf32> to vector<128x8xf32>
    %18 = vector.shape_cast %17 : vector<128x8xf32> to vector<2x64x8xf32>
    "tpu.trace_start"() <{level = 10 : i32, message = "tsd,tzd->tsz"}> : () -> ()
    %cst_11 = arith.constant dense<0.000000e+00> : vector<2x64x64xf32>
    %19 = tpu.matmul %14, %16, %cst_11 {dimension_numbers = #tpu.dot_dimension_numbers<[2], [2], [1], [1], [0, 0, 0, 1, 1, 1], [0], [0]>} : vector<2x64x8xf32>, vector<2x64x8xf32>, vector<2x64x64xf32> -> vector<2x64x64xf32>
    "tpu.trace_stop"() : () -> ()
    %cst_12 = arith.constant dense<0xFF800000> : vector<2x64xf32>
    %20 = vector.multi_reduction <maximumf>, %19, %cst_12 [2] : vector<2x64x64xf32> to vector<2x64xf32>
    %21 = vector.shape_cast %20 : vector<2x64xf32> to vector<2x64x1xf32>
    %22 = vector.broadcast %21 : vector<2x64x1xf32> to vector<2x64x64xf32>
    %23 = arith.subf %19, %22 : vector<2x64x64xf32>
    %24 = math.exp %23 : vector<2x64x64xf32>
    %cst_13 = arith.constant dense<0.000000e+00> : vector<2x64xf32>
    %25 = vector.multi_reduction <add>, %24, %cst_13 [2] : vector<2x64x64xf32> to vector<2x64xf32>
    %26 = vector.shape_cast %25 : vector<2x64xf32> to vector<2x64x1xf32>
    %27 = tpu.reciprocal %26 {approx = true} : vector<2x64x1xf32> -> vector<2x64x1xf32>
    %28 = vector.broadcast %27 : vector<2x64x1xf32> to vector<2x64x64xf32>
    %29 = arith.mulf %24, %28 : vector<2x64x64xf32>
    "tpu.trace_start"() <{level = 10 : i32, message = "tsz,tzd->tsd"}> : () -> ()
    %cst_14 = arith.constant dense<0.000000e+00> : vector<2x64x8xf32>
    %30 = tpu.matmul %29, %18, %cst_14 {dimension_numbers = #tpu.dot_dimension_numbers<[2], [1], [1], [2], [0, 0, 0, 1, 1, 2], [0], [0]>} : vector<2x64x64xf32>, vector<2x64x8xf32>, vector<2x64x8xf32> -> vector<2x64x8xf32>
    "tpu.trace_stop"() : () -> ()
    %31 = vector.shape_cast %30 : vector<2x64x8xf32> to vector<128x8xf32>
    %32 = vector.extract_strided_slice %7 {offsets = [0, 0], sizes = [8, 8], strides = [1, 1]} : vector<16x8xf32> to vector<8x8xf32>
    %cst_15 = arith.constant dense<0.000000e+00> : vector<128x8xf32>
    %33 = tpu.matmul %31, %32, %cst_15 {dimension_numbers = #tpu.dot_dimension_numbers<[1], [0], [0], [1], [0, 0, 1, 1], [], []>} : vector<128x8xf32>, vector<8x8xf32>, vector<128x8xf32> -> vector<128x8xf32>
    %34 = arith.addf %12, %33 : vector<128x8xf32>
    %35 = vector.extract_strided_slice %6 {offsets = [0, 8], sizes = [128, 8], strides = [1, 1]} : vector<128x48xf32> to vector<128x8xf32>
    %36 = vector.shape_cast %35 : vector<128x8xf32> to vector<2x64x8xf32>
    %37 = vector.extract_strided_slice %6 {offsets = [0, 24], sizes = [128, 8], strides = [1, 1]} : vector<128x48xf32> to vector<128x8xf32>
    %38 = vector.shape_cast %37 : vector<128x8xf32> to vector<2x64x8xf32>
    %39 = vector.extract_strided_slice %6 {offsets = [0, 40], sizes = [128, 8], strides = [1, 1]} : vector<128x48xf32> to vector<128x8xf32>
    %40 = vector.shape_cast %39 : vector<128x8xf32> to vector<2x64x8xf32>
    "tpu.trace_start"() <{level = 10 : i32, message = "tsd,tzd->tsz"}> : () -> ()
    %cst_16 = arith.constant dense<0.000000e+00> : vector<2x64x64xf32>
    %41 = tpu.matmul %36, %38, %cst_16 {dimension_numbers = #tpu.dot_dimension_numbers<[2], [2], [1], [1], [0, 0, 0, 1, 1, 1], [0], [0]>} : vector<2x64x8xf32>, vector<2x64x8xf32>, vector<2x64x64xf32> -> vector<2x64x64xf32>
    "tpu.trace_stop"() : () -> ()
    %cst_17 = arith.constant dense<0xFF800000> : vector<2x64xf32>
    %42 = vector.multi_reduction <maximumf>, %41, %cst_17 [2] : vector<2x64x64xf32> to vector<2x64xf32>
    %43 = vector.shape_cast %42 : vector<2x64xf32> to vector<2x64x1xf32>
    %44 = vector.broadcast %43 : vector<2x64x1xf32> to vector<2x64x64xf32>
    %45 = arith.subf %41, %44 : vector<2x64x64xf32>
    %46 = math.exp %45 : vector<2x64x64xf32>
    %cst_18 = arith.constant dense<0.000000e+00> : vector<2x64xf32>
    %47 = vector.multi_reduction <add>, %46, %cst_18 [2] : vector<2x64x64xf32> to vector<2x64xf32>
    %48 = vector.shape_cast %47 : vector<2x64xf32> to vector<2x64x1xf32>
    %49 = tpu.reciprocal %48 {approx = true} : vector<2x64x1xf32> -> vector<2x64x1xf32>
    %50 = vector.broadcast %49 : vector<2x64x1xf32> to vector<2x64x64xf32>
    %51 = arith.mulf %46, %50 : vector<2x64x64xf32>
    "tpu.trace_start"() <{level = 10 : i32, message = "tsz,tzd->tsd"}> : () -> ()
    %cst_19 = arith.constant dense<0.000000e+00> : vector<2x64x8xf32>
    %52 = tpu.matmul %51, %40, %cst_19 {dimension_numbers = #tpu.dot_dimension_numbers<[2], [1], [1], [2], [0, 0, 0, 1, 1, 2], [0], [0]>} : vector<2x64x64xf32>, vector<2x64x8xf32>, vector<2x64x8xf32> -> vector<2x64x8xf32>
    "tpu.trace_stop"() : () -> ()
    %53 = vector.shape_cast %52 : vector<2x64x8xf32> to vector<128x8xf32>
    %54 = vector.extract_strided_slice %7 {offsets = [8, 0], sizes = [8, 8], strides = [1, 1]} : vector<16x8xf32> to vector<8x8xf32>
    %cst_20 = arith.constant dense<0.000000e+00> : vector<128x8xf32>
    %55 = tpu.matmul %53, %54, %cst_20 {dimension_numbers = #tpu.dot_dimension_numbers<[1], [0], [0], [1], [0, 0, 1, 1], [], []>} : vector<128x8xf32>, vector<8x8xf32>, vector<128x8xf32> -> vector<128x8xf32>
    %56 = arith.addf %34, %55 : vector<128x8xf32>
    %57 = vector.shape_cast %56 : vector<128x8xf32> to vector<2x64x8xf32>
    %c0_21 = arith.constant 0 : index
    %c0_22 = arith.constant 0 : index
    %c0_23 = arith.constant 0 : index
    %58 = vector.load %arg6[%c0_21, %c0_22, %c0_23] : memref<2x64x8xf32, #tpu.memory_space<vmem>>, vector<2x64x8xf32>
    tpu.vector_store %arg6[%c0_21, %c0_22, %c0_23], %57 {strides = array<i32>} : memref<2x64x8xf32, #tpu.memory_space<vmem>>, vector<2x64x8xf32>,
    return
  }
  func.func @transform_0(%arg0: i32) -> (i32, i32, i32) {
    %c0_i32 = arith.constant 0 : i32
    %c0_i32_0 = arith.constant 0 : i32
    %c0_i32_1 = arith.constant 0 : i32
    return %arg0, %c0_i32, %c0_i32_0 : i32, i32, i32
  }
  func.func @transform_1(%arg0: i32) -> (i32, i32) {
    %c0_i32 = arith.constant 0 : i32
    %c0_i32_0 = arith.constant 0 : i32
    %c0_i32_1 = arith.constant 0 : i32
    return %c0_i32, %c0_i32_0 : i32, i32
  }
  func.func @transform_2(%arg0: i32) -> (i32, i32) {
    %c0_i32 = arith.constant 0 : i32
    %c0_i32_0 = arith.constant 0 : i32
    %c0_i32_1 = arith.constant 0 : i32
    return %c0_i32, %c0_i32_0 : i32, i32
  }
  func.func @transform_3(%arg0: i32) -> (i32, i32) {
    %c0_i32 = arith.constant 0 : i32
    %c0_i32_0 = arith.constant 0 : i32
    %c0_i32_1 = arith.constant 0 : i32
    return %c0_i32, %c0_i32_0 : i32, i32
  }
  func.func @transform_4(%arg0: i32) -> (i32, i32) {
    %c0_i32 = arith.constant 0 : i32
    %c0_i32_0 = arith.constant 0 : i32
    %c0_i32_1 = arith.constant 0 : i32
    return %c0_i32, %c0_i32_0 : i32, i32
  }
  func.func @transform_5(%arg0: i32) -> (i32, i32, i32) {
    %c0_i32 = arith.constant 0 : i32
    %c0_i32_0 = arith.constant 0 : i32
    %c0_i32_1 = arith.constant 0 : i32
    return %arg0, %c0_i32, %c0_i32_0 : i32, i32, i32
  }
}

</mosaic_0001>

<llo_original>
// kernel: tpu_custom_call.1
$region0: #{tpu_custom_call.1}
  #allocation0 [shape = 'u32[]', space=smem, size = 0x4, offset = 0x4, fixed_abs, tag = 'smem constant byte address 0x4 - core index']
  #allocation1 [shape = 'u32[144,128]{1,0:T(1,128)}', space=vmem, size = 0x12000, scoped, tag = 'internal scratch']
  %s0 = inlined_call_operand.vmem [shape: f32[4,64,8], index: 0, kind: input, shape index: {}]
  %s1 = inlined_call_operand.vmem [shape: f32[8,48], index: 1, kind: input, shape index: {}]
  %s2 = inlined_call_operand.vmem [shape: f32[1,48], index: 2, kind: input, shape index: {}]
  %s3 = inlined_call_operand.vmem [shape: f32[16,8], index: 3, kind: input, shape index: {}]
  %s4 = inlined_call_operand.vmem [shape: f32[1,8], index: 4, kind: input, shape index: {}]
  %s5 = inlined_call_operand.vmem [shape: f32[4,64,8], index: 5, kind: output, shape index: {}]
  %s6 = sld [smem:[#allocation0]]
  $region53: #{tpu_custom_call.1} parent=0
    _
  %s8 = ssub.s32 1, %s6
  %s9 = scalar_select 0, %s8, %s6
  loop: start=0, step=1, limit=4
  $region2: #{tpu_custom_call.1} parent=0 // loop_pre_header
    _
  $region3: #{tpu_custom_call.1} parent=0 // loop_header
    %s11 = sphi 0, %s15
    %p12 = scmp.ge.s32.totalorder %s11, 4
    %s21 = sphi 0, %s23
    %s24 = sphi 0, %s21
    %s25 = sphi 0, %s24
    %s41 = sphi 0, %s25
    %s45 = sphi 0, %s45
    %s47 = sphi 0, %s45
    %s48 = sphi 0, %s47
    %s62 = sphi 0, %s48
    %s66 = sphi 0, %s66
    %s68 = sphi 0, %s66
    %s69 = sphi 0, %s68
    %s83 = sphi 0, %s69
    %s87 = sphi 0, %s87
    %s89 = sphi 0, %s87
    %s90 = sphi 0, %s89
    %s104 = sphi 0, %s90
    %s108 = sphi 0, %s108
    %s110 = sphi 0, %s108
    %s111 = sphi 0, %s110
    %s125 = sphi 0, %s111
    %s131 = sphi 0, %s133
    %s134 = sphi 0, %s131
    %s135 = sphi 0, %s134
    %s151 = sphi 0, %s135
  $region4: #{tpu_custom_call.1} parent=0 // loop_header_branch
    %14 = sbr.rel (%p12) target = $region8
  $region5: #{tpu_custom_call.1} parent=0 // loop_body
    %s16 = ssub.s32 %s11, 1
    %s17 = ssub.s32 %s11, 2
    %s18 = sadd.s32 %s11, 1
    %s19 = ssub.s32 %s11, %s18
    %p20 = scmp.eq.s32.totalorder %s19, 0
    %s22 = sadd.s32 %s21, 1
    %s23 = scalar_select %p20, %s21, %s22
    %p26 = pneg %p20
    %p27 = scmp.eq.s32.totalorder %s11, 1
    %p28 = por %p26, %p27
    %p29 = scmp.ne.s32.totalorder %s21, %s24
    %p30 = scmp.eq.s32.totalorder %s11, 0
    %p31 = por %p29, %p30
    %p32 = scmp.ne.s32.totalorder %s21, %s24
    %p33 = scmp.eq.s32.totalorder %s16, 1
    %p34 = por %p32, %p33
    %p35 = scmp.ne.s32.totalorder %s24, %s25
    %p36 = scmp.eq.s32.totalorder %s16, 0
    %p37 = por %p35, %p36
    %p38 = scmp.ne.s32.totalorder %s24, %s25
    %p39 = scmp.eq.s32.totalorder %s17, 1
    %p40 = por %p38, %p39
    %p42 = scmp.ne.s32.totalorder %s25, %s41
    %p43 = scmp.eq.s32.totalorder %s17, 0
    %p44 = por %p42, %p43
    %s46 = sadd.s32 %s45, 1
    %p49 = scmp.eq.s32.totalorder %s11, 1
    %p50 = scmp.ne.s32.totalorder %s45, %s47
    %p51 = scmp.eq.s32.totalorder %s11, 0
    %p52 = por %p50, %p51
    %p53 = scmp.ne.s32.totalorder %s45, %s47
    %p54 = scmp.eq.s32.totalorder %s16, 1
    %p55 = por %p53, %p54
    %p56 = scmp.ne.s32.totalorder %s47, %s48
    %p57 = scmp.eq.s32.totalorder %s16, 0
    %p58 = por %p56, %p57
    %p59 = scmp.ne.s32.totalorder %s47, %s48
    %p60 = scmp.eq.s32.totalorder %s17, 1
    %p61 = por %p59, %p60
    %p63 = scmp.ne.s32.totalorder %s48, %s62
    %p64 = scmp.eq.s32.totalorder %s17, 0
    %p65 = por %p63, %p64
    %s67 = sadd.s32 %s66, 1
    %p70 = scmp.eq.s32.totalorder %s11, 1
    %p71 = scmp.ne.s32.totalorder %s66, %s68
    %p72 = scmp.eq.s32.totalorder %s11, 0
    %p73 = por %p71, %p72
    %p74 = scmp.ne.s32.totalorder %s66, %s68
    %p75 = scmp.eq.s32.totalorder %s16, 1
    %p76 = por %p74, %p75
    %p77 = scmp.ne.s32.totalorder %s68, %s69
    %p78 = scmp.eq.s32.totalorder %s16, 0
    %p79 = por %p77, %p78
    %p80 = scmp.ne.s32.totalorder %s68, %s69
    %p81 = scmp.eq.s32.totalorder %s17, 1
    %p82 = por %p80, %p81
    %p84 = scmp.ne.s32.totalorder %s69, %s83
    %p85 = scmp.eq.s32.totalorder %s17, 0
    %p86 = por %p84, %p85
    %s88 = sadd.s32 %s87, 1
    %p91 = scmp.eq.s32.totalorder %s11, 1
    %p92 = scmp.ne.s32.totalorder %s87, %s89
    %p93 = scmp.eq.s32.totalorder %s11, 0
    %p94 = por %p92, %p93
    %p95 = scmp.ne.s32.totalorder %s87, %s89
    %p96 = scmp.eq.s32.totalorder %s16, 1
    %p97 = por %p95, %p96
    %p98 = scmp.ne.s32.totalorder %s89, %s90
    %p99 = scmp.eq.s32.totalorder %s16, 0
    %p100 = por %p98, %p99
    %p101 = scmp.ne.s32.totalorder %s89, %s90
    %p102 = scmp.eq.s32.totalorder %s17, 1
    %p103 = por %p101, %p102
    %p105 = scmp.ne.s32.totalorder %s90, %s104
    %p106 = scmp.eq.s32.totalorder %s17, 0
    %p107 = por %p105, %p106
    %s109 = sadd.s32 %s108, 1
    %p112 = scmp.eq.s32.totalorder %s11, 1
    %p113 = scmp.ne.s32.totalorder %s108, %s110
    %p114 = scmp.eq.s32.totalorder %s11, 0
    %p115 = por %p113, %p114
    %p116 = scmp.ne.s32.totalorder %s108, %s110
    %p117 = scmp.eq.s32.totalorder %s16, 1
    %p118 = por %p116, %p117
    %p119 = scmp.ne.s32.totalorder %s110, %s111
    %p120 = scmp.eq.s32.totalorder %s16, 0
    %p121 = por %p119, %p120
    %p122 = scmp.ne.s32.totalorder %s110, %s111
    %p123 = scmp.eq.s32.totalorder %s17, 1
    %p124 = por %p122, %p123
    %p126 = scmp.ne.s32.totalorder %s111, %s125
    %p127 = scmp.eq.s32.totalorder %s17, 0
    %p128 = por %p126, %p127
    %s129 = ssub.s32 %s11, %s18
    %p130 = scmp.eq.s32.totalorder %s129, 0
    %s132 = sadd.s32 %s131, 1
    %s133 = scalar_select %p130, %s131, %s132
    %p136 = pneg %p130
    %p137 = scmp.eq.s32.totalorder %s11, 1
    %p138 = por %p136, %p137
    %p139 = scmp.ne.s32.totalorder %s131, %s134
    %p140 = scmp.eq.s32.totalorder %s11, 0
    %p141 = por %p139, %p140
    %p142 = scmp.ne.s32.totalorder %s131, %s134
    %p143 = scmp.eq.s32.totalorder %s16, 1
    %p144 = por %p142, %p143
    %p145 = scmp.ne.s32.totalorder %s134, %s135
    %p146 = scmp.eq.s32.totalorder %s16, 0
    %p147 = por %p145, %p146
    %p148 = scmp.ne.s32.totalorder %s134, %s135
    %p149 = scmp.eq.s32.totalorder %s17, 1
    %p150 = por %p148, %p149
    %p152 = scmp.ne.s32.totalorder %s135, %s151
    %p153 = scmp.eq.s32.totalorder %s17, 0
    %p154 = por %p152, %p153
    %p155 = scmp.le.s32.totalorder 1, %s11
    %p156 = scmp.lt.s32.totalorder %s11, 3
    %p157 = pnand %p155, %p156
    %p158 = pneg %p157
    // Predicated region
    $region9: #{tpu_custom_call.1} parent=5 // pred_check
      _
    $region10: #{tpu_custom_call.1} parent=5 // pred_check_branch
      %160 = sbr.rel (%p157) target = $region12
    $region11: #{tpu_custom_call.1} parent=5 // pred_region
      %s161 = ssub.s32 %s11, 1
      // Predicated region
      $region13: #{tpu_custom_call.1} parent=11 // pred_check
        %p162 = pneg %p58
      $region14: #{tpu_custom_call.1} parent=11 // pred_check_branch
        %164 = sbr.rel (%p162) target = $region16
      $region15: #{tpu_custom_call.1} parent=11 // pred_region
        _
      $region16: #{tpu_custom_call.1} parent=11 // pred_fallthru
        _
      // Predicated region
      $region17: #{tpu_custom_call.1} parent=11 // pred_check
        %p165 = pneg %p79
      $region18: #{tpu_custom_call.1} parent=11 // pred_check_branch
        %167 = sbr.rel (%p165) target = $region20
      $region19: #{tpu_custom_call.1} parent=11 // pred_region
        _
      $region20: #{tpu_custom_call.1} parent=11 // pred_fallthru
        _
      // Predicated region
      $region21: #{tpu_custom_call.1} parent=11 // pred_check
        %p168 = pneg %p100
      $region22: #{tpu_custom_call.1} parent=11 // pred_check_branch
        %170 = sbr.rel (%p168) target = $region24
      $region23: #{tpu_custom_call.1} parent=11 // pred_region
        _
      $region24: #{tpu_custom_call.1} parent=11 // pred_fallthru
        _
      // Predicated region
      $region25: #{tpu_custom_call.1} parent=11 // pred_check
        %p171 = pneg %p121
      $region26: #{tpu_custom_call.1} parent=11 // pred_check_branch
        %173 = sbr.rel (%p171) target = $region28
      $region27: #{tpu_custom_call.1} parent=11 // pred_region
        _
      $region28: #{tpu_custom_call.1} parent=11 // pred_fallthru
        _
    $region12: #{tpu_custom_call.1} parent=5 // pred_fallthru
      _
    %p174 = scmp.lt.s32.totalorder %s11, 2
    // Predicated region
    $region29: #{tpu_custom_call.1} parent=5 // pred_check
      %p175 = pneg %p174
    $region30: #{tpu_custom_call.1} parent=5 // pred_check_branch
      %177 = sbr.rel (%p175) target = $region32
    $region31: #{tpu_custom_call.1} parent=5 // pred_region
      // Predicated region
      $region33: #{tpu_custom_call.1} parent=31 // pred_check
        %p178 = pneg %p31
      $region34: #{tpu_custom_call.1} parent=31 // pred_check_branch
        %180 = sbr.rel (%p178) target = $region36
      $region35: #{tpu_custom_call.1} parent=31 // pred_region
        %s181 = smul.u32 2, %s11
        %p182 = scmp.lt.s32.totalorder %s181, 3
        %s183 = scalar_select %p182, %s181, 3
        %s184 = smul.addr %s183, 8
        %s185 = smul.addr %s184, 8
        %s186 = scalar_lea.vmem %s0, %s185
        %s187 = smul.u32 2, %s11
      $region36: #{tpu_custom_call.1} parent=31 // pred_fallthru
        _
    $region32: #{tpu_custom_call.1} parent=5 // pred_fallthru
      _
    %p188 = scmp.le.s32.totalorder 1, %s11
    %p189 = scmp.lt.s32.totalorder %s11, 3
    %p190 = pnand %p188, %p189
    %p191 = pneg %p190
    // Predicated region
    $region37: #{tpu_custom_call.1} parent=5 // pred_check
      _
    $region38: #{tpu_custom_call.1} parent=5 // pred_check_branch
      %193 = sbr.rel (%p190) target = $region40
    $region39: #{tpu_custom_call.1} parent=5 // pred_region
      %s194 = ssub.s32 %s11, 1
      %s195 = smul.u32 2, %s16
      %p196 = scmp.lt.s32.totalorder %s195, 3
      %s197 = scalar_select %p196, %s195, 3
      %s198 = smul.addr %s197, 8
      %s199 = smul.addr %s198, 8
      %s200 = scalar_lea.vmem %s0, %s199
      %p201 = pneg %p37
      %p202 = pneg %p34
      %p203 = pneg %p58
      %p204 = pneg %p55
      %p205 = pneg %p79
      %p206 = pneg %p76
      %p207 = pneg %p100
      %p208 = pneg %p97
      %p209 = pneg %p121
      %p210 = pneg %p118
      %p211 = pneg %p147
      %p212 = pneg %p144
      %s213 = smul.u32 2, %s16
      %p214 = scmp.lt.s32.totalorder %s213, 3
      %s215 = scalar_select %p214, %s213, 3
      %s216 = smul.addr %s215, 8
      %s217 = smul.addr %s216, 8
      %s218 = scalar_lea.vmem %s5, %s217
      %s219 = smul.u32 2, %s16
      %p220 = scmp.lt.s32.totalorder %s219, 3
      %s221 = scalar_select %p220, %s219, 3
      %s222 = smul.addr %s221, 8
      %s223 = smul.addr %s222, 8
      %s224 = scalar_lea.vmem %s0, %s223
      %s225 = smul.u32 2, %s16
      %s226 = smul.u32 2, %s16
      %p227 = scmp.lt.s32.totalorder %s226, 3
      %s228 = scalar_select %p227, %s226, 3
      %s229 = smul.addr %s228, 8
      %s230 = smul.addr %s229, 8
      %s231 = scalar_lea.vmem %s5, %s230
      %s232 = smul.u32 2, %s16
      %v233 = vld [vmem:[%s224] sm:$0xff]
      %v234 = vld [vmem:[%s224 + $0x8] sm:$0xff]
      %v235 = vld [vmem:[%s224 + $0x10] sm:$0xff]
      %v236 = vld [vmem:[%s224 + $0x18] sm:$0xff]
      %v237 = vld [vmem:[%s224 + $0x20] sm:$0xff]
      %v238 = vld [vmem:[%s224 + $0x28] sm:$0xff]
      %v239 = vld [vmem:[%s224 + $0x30] sm:$0xff]
      %v240 = vld [vmem:[%s224 + $0x38] sm:$0xff]
      %v241 = vld [vmem:[%s224 + $0x40] sm:$0xff]
      %v242 = vld [vmem:[%s224 + $0x48] sm:$0xff]
      %v243 = vld [vmem:[%s224 + $0x50] sm:$0xff]
      %v244 = vld [vmem:[%s224 + $0x58] sm:$0xff]
      %v245 = vld [vmem:[%s224 + $0x60] sm:$0xff]
      %v246 = vld [vmem:[%s224 + $0x68] sm:$0xff]
      %v247 = vld [vmem:[%s224 + $0x70] sm:$0xff]
      %v248 = vld [vmem:[%s224 + $0x78] sm:$0xff]
      %v249 = vld [vmem:[%s1] sm:$0xff]
      %v250 = vld [vmem:[%s2] sm:$0x1]
      %v252 = vlaneseq
      %v253 = vshrl.u32 %v252, 7
      %v254 = vsub.s32 0, %v253
      %v255 = vrot.slane %v250, %v254
      %vm257 = vcmask 64512
      %v259 = vsel %vm257, %v233, 0
      %v262 = vsel %vm257, %v234, 0
      %v265 = vsel %vm257, %v235, 0
      %v268 = vsel %vm257, %v236, 0
      %v271 = vsel %vm257, %v237, 0
      %v274 = vsel %vm257, %v238, 0
      %v277 = vsel %vm257, %v239, 0
      %v280 = vsel %vm257, %v240, 0
      %v283 = vsel %vm257, %v241, 0
      %v286 = vsel %vm257, %v242, 0
      %v289 = vsel %vm257, %v243, 0
      %v292 = vsel %vm257, %v244, 0
      %v295 = vsel %vm257, %v245, 0
      %v298 = vsel %vm257, %v246, 0
      %v301 = vsel %vm257, %v247, 0
      %v304 = vsel %vm257, %v248, 0
      %306 = vmatprep.subr.mxu0 0.0
      %307 = vmatpush1.msra.mxu0 %v249
      %308 = vmatprep.subr.mxu0 0.0
      %309 = vmatpush1.msra.mxu0 0.0
      %310 = vmatprep.subr.mxu0 0.0
      %311 = vmatpush1.msra.mxu0 0.0
      %312 = vmatprep.subr.mxu0 0.0
      %313 = vmatpush1.msra.mxu0 0.0
      %314 = vmatprep.subr.mxu0 0.0
      %315 = vmatpush1.msra.mxu0 0.0
      %316 = vmatprep.subr.mxu0 0.0
      %317 = vmatpush1.msra.mxu0 0.0
      %318 = vmatprep.subr.mxu0 0.0
      %319 = vmatpush1.msra.mxu0 0.0
      %320 = vmatprep.subr.mxu0 0.0
      %321 = vmatpush1.msra.mxu0 0.0
      %322 = vmatprep.subr.mxu0 0.0
      %323 = vmatpush1.msra.mxu0 0.0
      %324 = vmatprep.subr.mxu0 0.0
      %325 = vmatpush1.msra.mxu0 0.0
      %326 = vmatprep.subr.mxu0 0.0
      %327 = vmatpush1.msra.mxu0 0.0
      %328 = vmatprep.subr.mxu0 0.0
      %329 = vmatpush1.msra.mxu0 0.0
      %330 = vmatprep.subr.mxu0 0.0
      %331 = vmatpush1.msra.mxu0 0.0
      %332 = vmatprep.subr.mxu0 0.0
      %333 = vmatpush1.msra.mxu0 0.0
      %334 = vmatprep.subr.mxu0 0.0
      %335 = vmatpush1.msra.mxu0 0.0
      %336 = vmatprep.subr.mxu0 0.0
      %337 = vmatpush1.msra.mxu0 0.0
      %338 = vmatprep.subr.mxu0 0.0
      %339 = vmatpush1.msra.mxu0 0.0
      %340 = vmatprep.subr.mxu0 0.0
      %341 = vmatpush1.msra.mxu0 0.0
      %342 = vmatprep.subr.mxu0 0.0
      %343 = vmatpush1.msra.mxu0 0.0
      %344 = vmatprep.subr.mxu0 0.0
      %345 = vmatpush1.msra.mxu0 0.0
      %346 = vmatprep.subr.mxu0 0.0
      %347 = vmatpush1.msra.mxu0 0.0
      %348 = vmatprep.subr.mxu0 0.0
      %349 = vmatpush1.msra.mxu0 0.0
      %350 = vmatprep.subr.mxu0 0.0
      %351 = vmatpush1.msra.mxu0 0.0
      %352 = vmatprep.subr.mxu0 0.0
      %353 = vmatpush1.msra.mxu0 0.0
      %354 = vmatprep.subr.mxu0 0.0
      %355 = vmatpush1.msra.mxu0 0.0
      %356 = vmatprep.subr.mxu0 0.0
      %357 = vmatpush1.msra.mxu0 0.0
      %358 = vmatprep.subr.mxu0 0.0
      %359 = vmatpush1.msra.mxu0 0.0
      %360 = vmatprep.subr.mxu0 0.0
      %361 = vmatpush1.msra.mxu0 0.0
      %362 = vmatprep.subr.mxu0 0.0
      %363 = vmatpush1.msra.mxu0 0.0
      %364 = vmatprep.subr.mxu0 0.0
      %365 = vmatpush1.msra.mxu0 0.0
      %366 = vmatprep.subr.mxu0 0.0
      %367 = vmatpush1.msra.mxu0 0.0
      %368 = vmatprep.subr.mxu0 0.0
      %369 = vmatpush1.msra.mxu0 0.0
      %370 = vmatprep.mubr.f32.mxu0 0.0
      %371 = vmatmul.mubr.f32.gmra.mrb[0].mxu0 %v259
      %v372 = vpop.f32.mrb[0].mxu0
      %v373 = vadd.f32 %v255, %v372
      %v374 = vpop.f32.mrb[0].mxu0
      %375 = vmatprep.mubr.f32.mxu0 0.0
      %376 = vmatmul.mubr.f32.gmra.mrb[0].mxu0 %v262
      %v377 = vpop.f32.mrb[0].mxu0
      %v378 = vadd.f32 %v255, %v377
      %v379 = vpop.f32.mrb[0].mxu0
      %380 = vmatprep.mubr.f32.mxu0 0.0
      %381 = vmatmul.mubr.f32.gmra.mrb[0].mxu0 %v265
      %v382 = vpop.f32.mrb[0].mxu0
      %v383 = vadd.f32 %v255, %v382
      %v384 = vpop.f32.mrb[0].mxu0
      %385 = vmatprep.mubr.f32.mxu0 0.0
      %386 = vmatmul.mubr.f32.gmra.mrb[0].mxu0 %v268
      %v387 = vpop.f32.mrb[0].mxu0
      %v388 = vadd.f32 %v255, %v387
      %v389 = vpop.f32.mrb[0].mxu0
      %390 = vmatprep.mubr.f32.mxu0 0.0
      %391 = vmatmul.mubr.f32.gmra.mrb[0].mxu0 %v271
      %v392 = vpop.f32.mrb[0].mxu0
      %v393 = vadd.f32 %v255, %v392
      %v394 = vpop.f32.mrb[0].mxu0
      %395 = vmatprep.mubr.f32.mxu0 0.0
      %396 = vmatmul.mubr.f32.gmra.mrb[0].mxu0 %v274
      %v397 = vpop.f32.mrb[0].mxu0
      %v398 = vadd.f32 %v255, %v397
      %v399 = vpop.f32.mrb[0].mxu0
      %400 = vmatprep.mubr.f32.mxu0 0.0
      %401 = vmatmul.mubr.f32.gmra.mrb[0].mxu0 %v277
      %v402 = vpop.f32.mrb[0].mxu0
      %v403 = vadd.f32 %v255, %v402
      %v404 = vpop.f32.mrb[0].mxu0
      %405 = vmatprep.mubr.f32.mxu0 0.0
      %406 = vmatmul.mubr.f32.gmra.mrb[0].mxu0 %v280
      %v407 = vpop.f32.mrb[0].mxu0
      %v408 = vadd.f32 %v255, %v407
      %v409 = vpop.f32.mrb[0].mxu0
      %410 = vmatprep.mubr.f32.mxu0 0.0
      %411 = vmatmul.mubr.f32.gmra.mrb[0].mxu0 %v283
      %v412 = vpop.f32.mrb[0].mxu0
      %v413 = vadd.f32 %v255, %v412
      %v414 = vpop.f32.mrb[0].mxu0
      %415 = vmatprep.mubr.f32.mxu0 0.0
      %416 = vmatmul.mubr.f32.gmra.mrb[0].mxu0 %v286
      %v417 = vpop.f32.mrb[0].mxu0
      %v418 = vadd.f32 %v255, %v417
      %v419 = vpop.f32.mrb[0].mxu0
      %420 = vmatprep.mubr.f32.mxu0 0.0
      %421 = vmatmul.mubr.f32.gmra.mrb[0].mxu0 %v289
      %v422 = vpop.f32.mrb[0].mxu0
      %v423 = vadd.f32 %v255, %v422
      %v424 = vpop.f32.mrb[0].mxu0
      %425 = vmatprep.mubr.f32.mxu0 0.0
      %426 = vmatmul.mubr.f32.gmra.mrb[0].mxu0 %v292
      %v427 = vpop.f32.mrb[0].mxu0
      %v428 = vadd.f32 %v255, %v427
      %v429 = vpop.f32.mrb[0].mxu0
      %430 = vmatprep.mubr.f32.mxu0 0.0
      %431 = vmatmul.mubr.f32.gmra.mrb[0].mxu0 %v295
      %v432 = vpop.f32.mrb[0].mxu0
      %v433 = vadd.f32 %v255, %v432
      %v434 = vpop.f32.mrb[0].mxu0
      %435 = vmatprep.mubr.f32.mxu0 0.0
      %436 = vmatmul.mubr.f32.gmra.mrb[0].mxu0 %v298
      %v437 = vpop.f32.mrb[0].mxu0
      %v438 = vadd.f32 %v255, %v437
      %v439 = vpop.f32.mrb[0].mxu0
      %440 = vmatprep.mubr.f32.mxu0 0.0
      %441 = vmatmul.mubr.f32.gmra.mrb[0].mxu0 %v301
      %v442 = vpop.f32.mrb[0].mxu0
      %v443 = vadd.f32 %v255, %v442
      %v444 = vpop.f32.mrb[0].mxu0
      %445 = vmatprep.mubr.f32.mxu0 0.0
      %446 = vmatmul.mubr.f32.gmra.mrb[0].mxu0 %v304
      %v447 = vpop.f32.mrb[0].mxu0
      %v448 = vadd.f32 %v255, %v447
      %v449 = vpop.f32.mrb[0].mxu0
      %450 = vdwg.mxu0
      %v451 = vld [vmem:[%s3] sm:$0xff]
      %v452 = vld [vmem:[%s3 + $0x8] sm:$0xff]
      %v453 = vld [vmem:[%s4] sm:$0x1]
      %v454 = vmul.f32 %v233, 2.0
      %v455 = vmul.f32 %v234, 2.0
      %v456 = vmul.f32 %v235, 2.0
      %v457 = vmul.f32 %v236, 2.0
      %v458 = vmul.f32 %v237, 2.0
      %v459 = vmul.f32 %v238, 2.0
      %v460 = vmul.f32 %v239, 2.0
      %v461 = vmul.f32 %v240, 2.0
      %v462 = vmul.f32 %v241, 2.0
      %v463 = vmul.f32 %v242, 2.0
      %v464 = vmul.f32 %v243, 2.0
      %v465 = vmul.f32 %v244, 2.0
      %v466 = vmul.f32 %v245, 2.0
      %v467 = vmul.f32 %v246, 2.0
      %v468 = vmul.f32 %v247, 2.0
      %v469 = vmul.f32 %v248, 2.0
      %v471 = vlaneseq
      %v472 = vshrl.u32 %v471, 7
      %v473 = vsub.s32 0, %v472
      %v474 = vrot.slane %v453, %v473
      %v476 = vadd.f32 %v474, %v454
      %v477 = vadd.f32 %v474, %v455
      %v478 = vadd.f32 %v474, %v456
      %v479 = vadd.f32 %v474, %v457
      %v480 = vadd.f32 %v474, %v458
      %v481 = vadd.f32 %v474, %v459
      %v482 = vadd.f32 %v474, %v460
      %v483 = vadd.f32 %v474, %v461
      %v484 = vadd.f32 %v474, %v462
      %v485 = vadd.f32 %v474, %v463
      %v486 = vadd.f32 %v474, %v464
      %v487 = vadd.f32 %v474, %v465
      %v488 = vadd.f32 %v474, %v466
      %v489 = vadd.f32 %v474, %v467
      %v490 = vadd.f32 %v474, %v468
      %v491 = vadd.f32 %v474, %v469
      %500 = vrot.lane.b32.xlu0 %v373, 112
      %v501 = vpop.permute.xlu0 %500
      %502 = vrot.lane.b32.xlu0 %v378, 112
      %v503 = vpop.permute.xlu0 %502
      %504 = vrot.lane.b32.xlu0 %v383, 112
      %v505 = vpop.permute.xlu0 %504
      %506 = vrot.lane.b32.xlu0 %v388, 112
      %v507 = vpop.permute.xlu0 %506
      %508 = vrot.lane.b32.xlu0 %v393, 112
      %v509 = vpop.permute.xlu0 %508
      %510 = vrot.lane.b32.xlu0 %v398, 112
      %v511 = vpop.permute.xlu0 %510
      %512 = vrot.lane.b32.xlu0 %v403, 112
      %v513 = vpop.permute.xlu0 %512
      %514 = vrot.lane.b32.xlu0 %v408, 112
      %v515 = vpop.permute.xlu0 %514
      %v516 = vsel %vm257, %v373, 0
      %v518 = vsel %vm257, %v378, 0
      %v520 = vsel %vm257, %v383, 0
      %v522 = vsel %vm257, %v388, 0
      %v524 = vsel %vm257, %v393, 0
      %v526 = vsel %vm257, %v398, 0
      %v528 = vsel %vm257, %v403, 0
      %v530 = vsel %vm257, %v408, 0
      %v532 = vsel %vm257, %v501, 0
      %v534 = vsel %vm257, %v503, 0
      %v536 = vsel %vm257, %v505, 0
      %v538 = vsel %vm257, %v507, 0
      %v540 = vsel %vm257, %v509, 0
      %v542 = vsel %vm257, %v511, 0
      %v544 = vsel %vm257, %v513, 0
      %v546 = vsel %vm257, %v515, 0
      %548 = vmatprep.subr.mxu0 0.0
      %549 = vmatpush1.xpose.msra.mxu0 %v532
      %550 = vmatprep.subr.mxu0 0.0
      %551 = vmatpush1.xpose.msra.mxu0 %v534
      %552 = vmatprep.subr.mxu0 0.0
      %553 = vmatpush1.xpose.msra.mxu0 %v536
      %554 = vmatprep.subr.mxu0 0.0
      %555 = vmatpush1.xpose.msra.mxu0 %v538
      %556 = vmatprep.subr.mxu0 0.0
      %557 = vmatpush1.xpose.msra.mxu0 %v540
      %558 = vmatprep.subr.mxu0 0.0
      %559 = vmatpush1.xpose.msra.mxu0 %v542
      %560 = vmatprep.subr.mxu0 0.0
      %561 = vmatpush1.xpose.msra.mxu0 %v544
      %562 = vmatprep.subr.mxu0 0.0
      %563 = vmatpush1.xpose.msra.mxu0 %v546
      %564 = vmatprep.subr.mxu0 0.0
      %565 = vmatpush1.xpose.msra.mxu0 0.0
      %566 = vmatprep.subr.mxu0 0.0
      %567 = vmatpush1.xpose.msra.mxu0 0.0
      %568 = vmatprep.subr.mxu0 0.0
      %569 = vmatpush1.xpose.msra.mxu0 0.0
      %570 = vmatprep.subr.mxu0 0.0
      %571 = vmatpush1.xpose.msra.mxu0 0.0
      %572 = vmatprep.subr.mxu0 0.0
      %573 = vmatpush1.xpose.msra.mxu0 0.0
      %574 = vmatprep.subr.mxu0 0.0
      %575 = vmatpush1.xpose.msra.mxu0 0.0
      %576 = vmatprep.subr.mxu0 0.0
      %577 = vmatpush1.xpose.msra.mxu0 0.0
      %578 = vmatprep.subr.mxu0 0.0
      %579 = vmatpush1.xpose.msra.mxu0 0.0
      %580 = vmatprep.subr.mxu0 0.0
      %581 = vmatpush1.xpose.msra.mxu0 0.0
      %582 = vmatprep.subr.mxu0 0.0
      %583 = vmatpush1.xpose.msra.mxu0 0.0
      %584 = vmatprep.subr.mxu0 0.0
      %585 = vmatpush1.xpose.msra.mxu0 0.0
      %586 = vmatprep.subr.mxu0 0.0
      %587 = vmatpush1.xpose.msra.mxu0 0.0
      %588 = vmatprep.subr.mxu0 0.0
      %589 = vmatpush1.xpose.msra.mxu0 0.0
      %590 = vmatprep.subr.mxu0 0.0
      %591 = vmatpush1.xpose.msra.mxu0 0.0
      %592 = vmatprep.subr.mxu0 0.0
      %593 = vmatpush1.xpose.msra.mxu0 0.0
      %594 = vmatprep.subr.mxu0 0.0
      %595 = vmatpush1.xpose.msra.mxu0 0.0
      %596 = vmatprep.subr.mxu0 0.0
      %597 = vmatpush1.xpose.msra.mxu0 0.0
      %598 = vmatprep.subr.mxu0 0.0
      %599 = vmatpush1.xpose.msra.mxu0 0.0
      %600 = vmatprep.subr.mxu0 0.0
      %601 = vmatpush1.xpose.msra.mxu0 0.0
      %602 = vmatprep.subr.mxu0 0.0
      %603 = vmatpush1.xpose.msra.mxu0 0.0
      %604 = vmatprep.subr.mxu0 0.0
      %605 = vmatpush1.xpose.msra.mxu0 0.0
      %606 = vmatprep.subr.mxu0 0.0
      %607 = vmatpush1.xpose.msra.mxu0 0.0
      %608 = vmatprep.subr.mxu0 0.0
      %609 = vmatpush1.xpose.msra.mxu0 0.0
      %610 = vmatprep.subr.mxu0 0.0
      %611 = vmatpush1.xpose.msra.mxu0 0.0
      %612 = vmatprep.mubr.f32.mxu0 0.0
      %613 = vmatmul.mubr.f32.gmra.mrb[0].mxu0 %v516
      %v614 = vpop.f32.mrb[0].mxu0
      %v615 = vadd.f32 0.0, %v614
      %v616 = vpop.f32.mrb[0].mxu0
      %617 = vmatprep.mubr.f32.mxu0 0.0
      %618 = vmatmul.mubr.f32.gmra.mrb[0].mxu0 %v518
      %v619 = vpop.f32.mrb[0].mxu0
      %v620 = vadd.f32 0.0, %v619
      %v621 = vpop.f32.mrb[0].mxu0
      %622 = vmatprep.mubr.f32.mxu0 0.0
      %623 = vmatmul.mubr.f32.gmra.mrb[0].mxu0 %v520
      %v624 = vpop.f32.mrb[0].mxu0
      %v625 = vadd.f32 0.0, %v624
      %v626 = vpop.f32.mrb[0].mxu0
      %627 = vmatprep.mubr.f32.mxu0 0.0
      %628 = vmatmul.mubr.f32.gmra.mrb[0].mxu0 %v522
      %v629 = vpop.f32.mrb[0].mxu0
      %v630 = vadd.f32 0.0, %v629
      %v631 = vpop.f32.mrb[0].mxu0
      %632 = vmatprep.mubr.f32.mxu0 0.0
      %633 = vmatmul.mubr.f32.gmra.mrb[0].mxu0 %v524
      %v634 = vpop.f32.mrb[0].mxu0
      %v635 = vadd.f32 0.0, %v634
      %v636 = vpop.f32.mrb[0].mxu0
      %637 = vmatprep.mubr.f32.mxu0 0.0
      %638 = vmatmul.mubr.f32.gmra.mrb[0].mxu0 %v526
      %v639 = vpop.f32.mrb[0].mxu0
      %v640 = vadd.f32 0.0, %v639
      %v641 = vpop.f32.mrb[0].mxu0
      %642 = vmatprep.mubr.f32.mxu0 0.0
      %643 = vmatmul.mubr.f32.gmra.mrb[0].mxu0 %v528
      %v644 = vpop.f32.mrb[0].mxu0
      %v645 = vadd.f32 0.0, %v644
      %v646 = vpop.f32.mrb[0].mxu0
      %647 = vmatprep.mubr.f32.mxu0 0.0
      %648 = vmatmul.mubr.f32.gmra.mrb[0].mxu0 %v530
      %v649 = vpop.f32.mrb[0].mxu0
      %v650 = vadd.f32 0.0, %v649
      %v651 = vpop.f32.mrb[0].mxu0
      %652 = vdwg.mxu0
      %661 = vrot.lane.b32.xlu0 %v413, 112
      %v662 = vpop.permute.xlu0 %661
      %663 = vrot.lane.b32.xlu0 %v418, 112
      %v664 = vpop.permute.xlu0 %663
      %665 = vrot.lane.b32.xlu0 %v423, 112
      %v666 = vpop.permute.xlu0 %665
      %667 = vrot.lane.b32.xlu0 %v428, 112
      %v668 = vpop.permute.xlu0 %667
      %669 = vrot.lane.b32.xlu0 %v433, 112
      %v670 = vpop.permute.xlu0 %669
      %671 = vrot.lane.b32.xlu0 %v438, 112
      %v672 = vpop.permute.xlu0 %671
      %673 = vrot.lane.b32.xlu0 %v443, 112
      %v674 = vpop.permute.xlu0 %673
      %675 = vrot.lane.b32.xlu0 %v448, 112
      %v676 = vpop.permute.xlu0 %675
      %v677 = vsel %vm257, %v413, 0
      %v679 = vsel %vm257, %v418, 0
      %v681 = vsel %vm257, %v423, 0
      %v683 = vsel %vm257, %v428, 0
      %v685 = vsel %vm257, %v433, 0
      %v687 = vsel %vm257, %v438, 0
      %v689 = vsel %vm257, %v443, 0
      %v691 = vsel %vm257, %v448, 0
      %v693 = vsel %vm257, %v662, 0
      %v695 = vsel %vm257, %v664, 0
      %v697 = vsel %vm257, %v666, 0
      %v699 = vsel %vm257, %v668, 0
      %v701 = vsel %vm257, %v670, 0
      %v703 = vsel %vm257, %v672, 0
      %v705 = vsel %vm257, %v674, 0
      %v707 = vsel %vm257, %v676, 0
      %709 = vmatprep.subr.mxu0 0.0
      %710 = vmatpush1.xpose.msra.mxu0 %v693
      %711 = vmatprep.subr.mxu0 0.0
      %712 = vmatpush1.xpose.msra.mxu0 %v695
      %713 = vmatprep.subr.mxu0 0.0
      %714 = vmatpush1.xpose.msra.mxu0 %v697
      %715 = vmatprep.subr.mxu0 0.0
      %716 = vmatpush1.xpose.msra.mxu0 %v699
      %717 = vmatprep.subr.mxu0 0.0
      %718 = vmatpush1.xpose.msra.mxu0 %v701
      %719 = vmatprep.subr.mxu0 0.0
      %720 = vmatpush1.xpose.msra.mxu0 %v703
      %721 = vmatprep.subr.mxu0 0.0
      %722 = vmatpush1.xpose.msra.mxu0 %v705
      %723 = vmatprep.subr.mxu0 0.0
      %724 = vmatpush1.xpose.msra.mxu0 %v707
      %725 = vmatprep.subr.mxu0 0.0
      %726 = vmatpush1.xpose.msra.mxu0 0.0
      %727 = vmatprep.subr.mxu0 0.0
      %728 = vmatpush1.xpose.msra.mxu0 0.0
      %729 = vmatprep.subr.mxu0 0.0
      %730 = vmatpush1.xpose.msra.mxu0 0.0
      %731 = vmatprep.subr.mxu0 0.0
      %732 = vmatpush1.xpose.msra.mxu0 0.0
      %733 = vmatprep.subr.mxu0 0.0
      %734 = vmatpush1.xpose.msra.mxu0 0.0
      %735 = vmatprep.subr.mxu0 0.0
      %736 = vmatpush1.xpose.msra.mxu0 0.0
      %737 = vmatprep.subr.mxu0 0.0
      %738 = vmatpush1.xpose.msra.mxu0 0.0
      %739 = vmatprep.subr.mxu0 0.0
      %740 = vmatpush1.xpose.msra.mxu0 0.0
      %741 = vmatprep.subr.mxu0 0.0
      %742 = vmatpush1.xpose.msra.mxu0 0.0
      %743 = vmatprep.subr.mxu0 0.0
      %744 = vmatpush1.xpose.msra.mxu0 0.0
      %745 = vmatprep.subr.mxu0 0.0
      %746 = vmatpush1.xpose.msra.mxu0 0.0
      %747 = vmatprep.subr.mxu0 0.0
      %748 = vmatpush1.xpose.msra.mxu0 0.0
      %749 = vmatprep.subr.mxu0 0.0
      %750 = vmatpush1.xpose.msra.mxu0 0.0
      %751 = vmatprep.subr.mxu0 0.0
      %752 = vmatpush1.xpose.msra.mxu0 0.0
      %753 = vmatprep.subr.mxu0 0.0
      %754 = vmatpush1.xpose.msra.mxu0 0.0
      %755 = vmatprep.subr.mxu0 0.0
      %756 = vmatpush1.xpose.msra.mxu0 0.0
      %757 = vmatprep.subr.mxu0 0.0
      %758 = vmatpush1.xpose.msra.mxu0 0.0
      %759 = vmatprep.subr.mxu0 0.0
      %760 = vmatpush1.xpose.msra.mxu0 0.0
      %761 = vmatprep.subr.mxu0 0.0
      %762 = vmatpush1.xpose.msra.mxu0 0.0
      %763 = vmatprep.subr.mxu0 0.0
      %764 = vmatpush1.xpose.msra.mxu0 0.0
      %765 = vmatprep.subr.mxu0 0.0
      %766 = vmatpush1.xpose.msra.mxu0 0.0
      %767 = vmatprep.subr.mxu0 0.0
      %768 = vmatpush1.xpose.msra.mxu0 0.0
      %769 = vmatprep.subr.mxu0 0.0
      %770 = vmatpush1.xpose.msra.mxu0 0.0
      %771 = vmatprep.subr.mxu0 0.0
      %772 = vmatpush1.xpose.msra.mxu0 0.0
      %773 = vmatprep.mubr.f32.mxu0 0.0
      %774 = vmatmul.mubr.f32.gmra.mrb[0].mxu0 %v677
      %v775 = vpop.f32.mrb[0].mxu0
      %v776 = vadd.f32 0.0, %v775
      %v777 = vpop.f32.mrb[0].mxu0
      %778 = vmatprep.mubr.f32.mxu0 0.0
      %779 = vmatmul.mubr.f32.gmra.mrb[0].mxu0 %v679
      %v780 = vpop.f32.mrb[0].mxu0
      %v781 = vadd.f32 0.0, %v780
      %v782 = vpop.f32.mrb[0].mxu0
      %783 = vmatprep.mubr.f32.mxu0 0.0
      %784 = vmatmul.mubr.f32.gmra.mrb[0].mxu0 %v681
      %v785 = vpop.f32.mrb[0].mxu0
      %v786 = vadd.f32 0.0, %v785
      %v787 = vpop.f32.mrb[0].mxu0
      %788 = vmatprep.mubr.f32.mxu0 0.0
      %789 = vmatmul.mubr.f32.gmra.mrb[0].mxu0 %v683
      %v790 = vpop.f32.mrb[0].mxu0
      %v791 = vadd.f32 0.0, %v790
      %v792 = vpop.f32.mrb[0].mxu0
      %793 = vmatprep.mubr.f32.mxu0 0.0
      %794 = vmatmul.mubr.f32.gmra.mrb[0].mxu0 %v685
      %v795 = vpop.f32.mrb[0].mxu0
      %v796 = vadd.f32 0.0, %v795
      %v797 = vpop.f32.mrb[0].mxu0
      %798 = vmatprep.mubr.f32.mxu0 0.0
      %799 = vmatmul.mubr.f32.gmra.mrb[0].mxu0 %v687
      %v800 = vpop.f32.mrb[0].mxu0
      %v801 = vadd.f32 0.0, %v800
      %v802 = vpop.f32.mrb[0].mxu0
      %803 = vmatprep.mubr.f32.mxu0 0.0
      %804 = vmatmul.mubr.f32.gmra.mrb[0].mxu0 %v689
      %v805 = vpop.f32.mrb[0].mxu0
      %v806 = vadd.f32 0.0, %v805
      %v807 = vpop.f32.mrb[0].mxu0
      %808 = vmatprep.mubr.f32.mxu0 0.0
      %809 = vmatmul.mubr.f32.gmra.mrb[0].mxu0 %v691
      %v810 = vpop.f32.mrb[0].mxu0
      %v811 = vadd.f32 0.0, %v810
      %v812 = vpop.f32.mrb[0].mxu0
      %813 = vdwg.mxu0
      %vm814 = vcmask 523264
      %v815 = vsel %vm814, %v615, -inf
      %816 = vmax.xlane.f32.xlu0 %v815
      %v817 = vpop.xlane.xlu0 %816
      %v818 = vsel %vm814, %v620, -inf
      %819 = vmax.xlane.f32.xlu0 %v818
      %v820 = vpop.xlane.xlu0 %819
      %v821 = vsel %vm814, %v625, -inf
      %822 = vmax.xlane.f32.xlu0 %v821
      %v823 = vpop.xlane.xlu0 %822
      %v824 = vsel %vm814, %v630, -inf
      %825 = vmax.xlane.f32.xlu0 %v824
      %v826 = vpop.xlane.xlu0 %825
      %v827 = vsel %vm814, %v635, -inf
      %828 = vmax.xlane.f32.xlu0 %v827
      %v829 = vpop.xlane.xlu0 %828
      %v830 = vsel %vm814, %v640, -inf
      %831 = vmax.xlane.f32.xlu0 %v830
      %v832 = vpop.xlane.xlu0 %831
      %v833 = vsel %vm814, %v645, -inf
      %834 = vmax.xlane.f32.xlu0 %v833
      %v835 = vpop.xlane.xlu0 %834
      %v836 = vsel %vm814, %v650, -inf
      %837 = vmax.xlane.f32.xlu0 %v836
      %v838 = vpop.xlane.xlu0 %837
      %v839 = vsel %vm814, %v776, -inf
      %840 = vmax.xlane.f32.xlu0 %v839
      %v841 = vpop.xlane.xlu0 %840
      %v842 = vsel %vm814, %v781, -inf
      %843 = vmax.xlane.f32.xlu0 %v842
      %v844 = vpop.xlane.xlu0 %843
      %v845 = vsel %vm814, %v786, -inf
      %846 = vmax.xlane.f32.xlu0 %v845
      %v847 = vpop.xlane.xlu0 %846
      %v848 = vsel %vm814, %v791, -inf
      %849 = vmax.xlane.f32.xlu0 %v848
      %v850 = vpop.xlane.xlu0 %849
      %v851 = vsel %vm814, %v796, -inf
      %852 = vmax.xlane.f32.xlu0 %v851
      %v853 = vpop.xlane.xlu0 %852
      %v854 = vsel %vm814, %v801, -inf
      %855 = vmax.xlane.f32.xlu0 %v854
      %v856 = vpop.xlane.xlu0 %855
      %v857 = vsel %vm814, %v806, -inf
      %858 = vmax.xlane.f32.xlu0 %v857
      %v859 = vpop.xlane.xlu0 %858
      %v860 = vsel %vm814, %v811, -inf
      %861 = vmax.xlane.f32.xlu0 %v860
      %v862 = vpop.xlane.xlu0 %861
      %v863 = vsub.f32 %v615, %v817
      %v864 = vsub.f32 %v620, %v820
      %v865 = vsub.f32 %v625, %v823
      %v866 = vsub.f32 %v630, %v826
      %v867 = vsub.f32 %v635, %v829
      %v868 = vsub.f32 %v640, %v832
      %v869 = vsub.f32 %v645, %v835
      %v870 = vsub.f32 %v650, %v838
      %v871 = vsub.f32 %v776, %v841
      %v872 = vsub.f32 %v781, %v844
      %v873 = vsub.f32 %v786, %v847
      %v874 = vsub.f32 %v791, %v850
      %v875 = vsub.f32 %v796, %v853
      %v876 = vsub.f32 %v801, %v856
      %v877 = vsub.f32 %v806, %v859
      %v878 = vsub.f32 %v811, %v862
      %v879 = vmul.f32 %v863, 1.442695
      %v880 = vpow.pop %v879
      %v881 = vmul.f32 %v864, 1.442695
      %v882 = vpow.pop %v881
      %v883 = vmul.f32 %v865, 1.442695
      %v884 = vpow.pop %v883
      %v885 = vmul.f32 %v866, 1.442695
      %v886 = vpow.pop %v885
      %v887 = vmul.f32 %v867, 1.442695
      %v888 = vpow.pop %v887
      %v889 = vmul.f32 %v868, 1.442695
      %v890 = vpow.pop %v889
      %v891 = vmul.f32 %v869, 1.442695
      %v892 = vpow.pop %v891
      %v893 = vmul.f32 %v870, 1.442695
      %v894 = vpow.pop %v893
      %v895 = vmul.f32 %v871, 1.442695
      %v896 = vpow.pop %v895
      %v897 = vmul.f32 %v872, 1.442695
      %v898 = vpow.pop %v897
      %v899 = vmul.f32 %v873, 1.442695
      %v900 = vpow.pop %v899
      %v901 = vmul.f32 %v874, 1.442695
      %v902 = vpow.pop %v901
      %v903 = vmul.f32 %v875, 1.442695
      %v904 = vpow.pop %v903
      %v905 = vmul.f32 %v876, 1.442695
      %v906 = vpow.pop %v905
      %v907 = vmul.f32 %v877, 1.442695
      %v908 = vpow.pop %v907
      %v909 = vmul.f32 %v878, 1.442695
      %v910 = vpow.pop %v909
      %v911 = vsel %vm814, %v880, 0.0
      %912 = vadd.xlane.f32.xlu0 %v911
      %v913 = vpop.xlane.xlu0 %912
      %v914 = vsel %vm814, %v882, 0.0
      %915 = vadd.xlane.f32.xlu0 %v914
      %v916 = vpop.xlane.xlu0 %915
      %v917 = vsel %vm814, %v884, 0.0
      %918 = vadd.xlane.f32.xlu0 %v917
      %v919 = vpop.xlane.xlu0 %918
      %v920 = vsel %vm814, %v886, 0.0
      %921 = vadd.xlane.f32.xlu0 %v920
      %v922 = vpop.xlane.xlu0 %921
      %v923 = vsel %vm814, %v888, 0.0
      %924 = vadd.xlane.f32.xlu0 %v923
      %v925 = vpop.xlane.xlu0 %924
      %v926 = vsel %vm814, %v890, 0.0
      %927 = vadd.xlane.f32.xlu0 %v926
      %v928 = vpop.xlane.xlu0 %927
      %v929 = vsel %vm814, %v892, 0.0
      %930 = vadd.xlane.f32.xlu0 %v929
      %v931 = vpop.xlane.xlu0 %930
      %v932 = vsel %vm814, %v894, 0.0
      %933 = vadd.xlane.f32.xlu0 %v932
      %v934 = vpop.xlane.xlu0 %933
      %v935 = vsel %vm814, %v896, 0.0
      %936 = vadd.xlane.f32.xlu0 %v935
      %v937 = vpop.xlane.xlu0 %936
      %v938 = vsel %vm814, %v898, 0.0
      %939 = vadd.xlane.f32.xlu0 %v938
      %v940 = vpop.xlane.xlu0 %939
      %v941 = vsel %vm814, %v900, 0.0
      %942 = vadd.xlane.f32.xlu0 %v941
      %v943 = vpop.xlane.xlu0 %942
      %v944 = vsel %vm814, %v902, 0.0
      %945 = vadd.xlane.f32.xlu0 %v944
      %v946 = vpop.xlane.xlu0 %945
      %v947 = vsel %vm814, %v904, 0.0
      %948 = vadd.xlane.f32.xlu0 %v947
      %v949 = vpop.xlane.xlu0 %948
      %v950 = vsel %vm814, %v906, 0.0
      %951 = vadd.xlane.f32.xlu0 %v950
      %v952 = vpop.xlane.xlu0 %951
      %v953 = vsel %vm814, %v908, 0.0
      %954 = vadd.xlane.f32.xlu0 %v953
      %v955 = vpop.xlane.xlu0 %954
      %v956 = vsel %vm814, %v910, 0.0
      %957 = vadd.xlane.f32.xlu0 %v956
      %v958 = vpop.xlane.xlu0 %957
      %v959 = vrcp.pop %v913
      %v960 = vrcp.pop %v916
      %v961 = vrcp.pop %v919
      %v962 = vrcp.pop %v922
      %v963 = vrcp.pop %v925
      %v964 = vrcp.pop %v928
      %v965 = vrcp.pop %v931
      %v966 = vrcp.pop %v934
      %v967 = vrcp.pop %v937
      %v968 = vrcp.pop %v940
      %v969 = vrcp.pop %v943
      %v970 = vrcp.pop %v946
      %v971 = vrcp.pop %v949
      %v972 = vrcp.pop %v952
      %v973 = vrcp.pop %v955
      %v974 = vrcp.pop %v958
      %v975 = vmul.f32 %v880, %v959
      %v976 = vmul.f32 %v882, %v960
      %v977 = vmul.f32 %v884, %v961
      %v978 = vmul.f32 %v886, %v962
      %v979 = vmul.f32 %v888, %v963
      %v980 = vmul.f32 %v890, %v964
      %v981 = vmul.f32 %v892, %v965
      %v982 = vmul.f32 %v894, %v966
      %v983 = vmul.f32 %v896, %v967
      %v984 = vmul.f32 %v898, %v968
      %v985 = vmul.f32 %v900, %v969
      %v986 = vmul.f32 %v902, %v970
      %v987 = vmul.f32 %v904, %v971
      %v988 = vmul.f32 %v906, %v972
      %v989 = vmul.f32 %v908, %v973
      %v990 = vmul.f32 %v910, %v974
      %991 = vrot.lane.b32.xlu0 %v373, 96
      %v992 = vpop.permute.xlu0 %991
      %993 = vrot.lane.b32.xlu0 %v378, 96
      %v994 = vpop.permute.xlu0 %993
      %995 = vrot.lane.b32.xlu0 %v383, 96
      %v996 = vpop.permute.xlu0 %995
      %997 = vrot.lane.b32.xlu0 %v388, 96
      %v998 = vpop.permute.xlu0 %997
      %999 = vrot.lane.b32.xlu0 %v393, 96
      %v1000 = vpop.permute.xlu0 %999
      %1001 = vrot.lane.b32.xlu0 %v398, 96
      %v1002 = vpop.permute.xlu0 %1001
      %1003 = vrot.lane.b32.xlu0 %v403, 96
      %v1004 = vpop.permute.xlu0 %1003
      %1005 = vrot.lane.b32.xlu0 %v408, 96
      %v1006 = vpop.permute.xlu0 %1005
      %v1016 = vsel %vm814, %v975, 0
      %v1019 = vsel %vm814, %v976, 0
      %v1022 = vsel %vm814, %v977, 0
      %v1025 = vsel %vm814, %v978, 0
      %v1028 = vsel %vm814, %v979, 0
      %v1031 = vsel %vm814, %v980, 0
      %v1034 = vsel %vm814, %v981, 0
      %v1037 = vsel %vm814, %v982, 0
      %1039 = vmatprep.subr.mxu0 0.0
      %1040 = vmatpush1.msra.mxu0 %v992
      %1041 = vmatprep.subr.mxu0 0.0
      %1042 = vmatpush1.msra.mxu0 %v994
      %1043 = vmatprep.subr.mxu0 0.0
      %1044 = vmatpush1.msra.mxu0 %v996
      %1045 = vmatprep.subr.mxu0 0.0
      %1046 = vmatpush1.msra.mxu0 %v998
      %1047 = vmatprep.subr.mxu0 0.0
      %1048 = vmatpush1.msra.mxu0 %v1000
      %1049 = vmatprep.subr.mxu0 0.0
      %1050 = vmatpush1.msra.mxu0 %v1002
      %1051 = vmatprep.subr.mxu0 0.0
      %1052 = vmatpush1.msra.mxu0 %v1004
      %1053 = vmatprep.subr.mxu0 0.0
      %1054 = vmatpush1.msra.mxu0 %v1006
      %1055 = vmatprep.subr.mxu0 0.0
      %1056 = vmatpush1.msra.mxu0 0.0
      %1057 = vmatprep.subr.mxu0 0.0
      %1058 = vmatpush1.msra.mxu0 0.0
      %1059 = vmatprep.subr.mxu0 0.0
      %1060 = vmatpush1.msra.mxu0 0.0
      %1061 = vmatprep.subr.mxu0 0.0
      %1062 = vmatpush1.msra.mxu0 0.0
      %1063 = vmatprep.subr.mxu0 0.0
      %1064 = vmatpush1.msra.mxu0 0.0
      %1065 = vmatprep.subr.mxu0 0.0
      %1066 = vmatpush1.msra.mxu0 0.0
      %1067 = vmatprep.subr.mxu0 0.0
      %1068 = vmatpush1.msra.mxu0 0.0
      %1069 = vmatprep.subr.mxu0 0.0
      %1070 = vmatpush1.msra.mxu0 0.0
      %1071 = vmatprep.subr.mxu0 0.0
      %1072 = vmatpush1.msra.mxu0 0.0
      %1073 = vmatprep.subr.mxu0 0.0
      %1074 = vmatpush1.msra.mxu0 0.0
      %1075 = vmatprep.subr.mxu0 0.0
      %1076 = vmatpush1.msra.mxu0 0.0
      %1077 = vmatprep.subr.mxu0 0.0
      %1078 = vmatpush1.msra.mxu0 0.0
      %1079 = vmatprep.subr.mxu0 0.0
      %1080 = vmatpush1.msra.mxu0 0.0
      %1081 = vmatprep.subr.mxu0 0.0
      %1082 = vmatpush1.msra.mxu0 0.0
      %1083 = vmatprep.subr.mxu0 0.0
      %1084 = vmatpush1.msra.mxu0 0.0
      %1085 = vmatprep.subr.mxu0 0.0
      %1086 = vmatpush1.msra.mxu0 0.0
      %1087 = vmatprep.subr.mxu0 0.0
      %1088 = vmatpush1.msra.mxu0 0.0
      %1089 = vmatprep.subr.mxu0 0.0
      %1090 = vmatpush1.msra.mxu0 0.0
      %1091 = vmatprep.subr.mxu0 0.0
      %1092 = vmatpush1.msra.mxu0 0.0
      %1093 = vmatprep.subr.mxu0 0.0
      %1094 = vmatpush1.msra.mxu0 0.0
      %1095 = vmatprep.subr.mxu0 0.0
      %1096 = vmatpush1.msra.mxu0 0.0
      %1097 = vmatprep.subr.mxu0 0.0
      %1098 = vmatpush1.msra.mxu0 0.0
      %1099 = vmatprep.subr.mxu0 0.0
      %1100 = vmatpush1.msra.mxu0 0.0
      %1101 = vmatprep.subr.mxu0 0.0
      %1102 = vmatpush1.msra.mxu0 0.0
      %1103 = vmatprep.mubr.f32.mxu0 0.0
      %1104 = vmatmul.mubr.f32.gmra.mrb[0].mxu0 %v1016
      %v1105 = vpop.f32.mrb[0].mxu0
      %v1106 = vadd.f32 0.0, %v1105
      %v1107 = vpop.f32.mrb[0].mxu0
      %1108 = vmatprep.mubr.f32.mxu0 0.0
      %1109 = vmatmul.mubr.f32.gmra.mrb[0].mxu0 %v1019
      %v1110 = vpop.f32.mrb[0].mxu0
      %v1111 = vadd.f32 0.0, %v1110
      %v1112 = vpop.f32.mrb[0].mxu0
      %1113 = vmatprep.mubr.f32.mxu0 0.0
      %1114 = vmatmul.mubr.f32.gmra.mrb[0].mxu0 %v1022
      %v1115 = vpop.f32.mrb[0].mxu0
      %v1116 = vadd.f32 0.0, %v1115
      %v1117 = vpop.f32.mrb[0].mxu0
      %1118 = vmatprep.mubr.f32.mxu0 0.0
      %1119 = vmatmul.mubr.f32.gmra.mrb[0].mxu0 %v1025
      %v1120 = vpop.f32.mrb[0].mxu0
      %v1121 = vadd.f32 0.0, %v1120
      %v1122 = vpop.f32.mrb[0].mxu0
      %1123 = vmatprep.mubr.f32.mxu0 0.0
      %1124 = vmatmul.mubr.f32.gmra.mrb[0].mxu0 %v1028
      %v1125 = vpop.f32.mrb[0].mxu0
      %v1126 = vadd.f32 0.0, %v1125
      %v1127 = vpop.f32.mrb[0].mxu0
      %1128 = vmatprep.mubr.f32.mxu0 0.0
      %1129 = vmatmul.mubr.f32.gmra.mrb[0].mxu0 %v1031
      %v1130 = vpop.f32.mrb[0].mxu0
      %v1131 = vadd.f32 0.0, %v1130
      %v1132 = vpop.f32.mrb[0].mxu0
      %1133 = vmatprep.mubr.f32.mxu0 0.0
      %1134 = vmatmul.mubr.f32.gmra.mrb[0].mxu0 %v1034
      %v1135 = vpop.f32.mrb[0].mxu0
      %v1136 = vadd.f32 0.0, %v1135
      %v1137 = vpop.f32.mrb[0].mxu0
      %1138 = vmatprep.mubr.f32.mxu0 0.0
      %1139 = vmatmul.mubr.f32.gmra.mrb[0].mxu0 %v1037
      %v1140 = vpop.f32.mrb[0].mxu0
      %v1141 = vadd.f32 0.0, %v1140
      %v1142 = vpop.f32.mrb[0].mxu0
      %1143 = vdwg.mxu0
      %1144 = vrot.lane.b32.xlu0 %v413, 96
      %v1145 = vpop.permute.xlu0 %1144
      %1146 = vrot.lane.b32.xlu0 %v418, 96
      %v1147 = vpop.permute.xlu0 %1146
      %1148 = vrot.lane.b32.xlu0 %v423, 96
      %v1149 = vpop.permute.xlu0 %1148
      %1150 = vrot.lane.b32.xlu0 %v428, 96
      %v1151 = vpop.permute.xlu0 %1150
      %1152 = vrot.lane.b32.xlu0 %v433, 96
      %v1153 = vpop.permute.xlu0 %1152
      %1154 = vrot.lane.b32.xlu0 %v438, 96
      %v1155 = vpop.permute.xlu0 %1154
      %1156 = vrot.lane.b32.xlu0 %v443, 96
      %v1157 = vpop.permute.xlu0 %1156
      %1158 = vrot.lane.b32.xlu0 %v448, 96
      %v1159 = vpop.permute.xlu0 %1158
      %v1169 = vsel %vm814, %v983, 0
      %v1172 = vsel %vm814, %v984, 0
      %v1175 = vsel %vm814, %v985, 0
      %v1178 = vsel %vm814, %v986, 0
      %v1181 = vsel %vm814, %v987, 0
      %v1184 = vsel %vm814, %v988, 0
      %v1187 = vsel %vm814, %v989, 0
      %v1190 = vsel %vm814, %v990, 0
      %1192 = vmatprep.subr.mxu0 0.0
      %1193 = vmatpush1.msra.mxu0 %v1145
      %1194 = vmatprep.subr.mxu0 0.0
      %1195 = vmatpush1.msra.mxu0 %v1147
      %1196 = vmatprep.subr.mxu0 0.0
      %1197 = vmatpush1.msra.mxu0 %v1149
      %1198 = vmatprep.subr.mxu0 0.0
      %1199 = vmatpush1.msra.mxu0 %v1151
      %1200 = vmatprep.subr.mxu0 0.0
      %1201 = vmatpush1.msra.mxu0 %v1153
      %1202 = vmatprep.subr.mxu0 0.0
      %1203 = vmatpush1.msra.mxu0 %v1155
      %1204 = vmatprep.subr.mxu0 0.0
      %1205 = vmatpush1.msra.mxu0 %v1157
      %1206 = vmatprep.subr.mxu0 0.0
      %1207 = vmatpush1.msra.mxu0 %v1159
      %1208 = vmatprep.subr.mxu0 0.0
      %1209 = vmatpush1.msra.mxu0 0.0
      %1210 = vmatprep.subr.mxu0 0.0
      %1211 = vmatpush1.msra.mxu0 0.0
      %1212 = vmatprep.subr.mxu0 0.0
      %1213 = vmatpush1.msra.mxu0 0.0
      %1214 = vmatprep.subr.mxu0 0.0
      %1215 = vmatpush1.msra.mxu0 0.0
      %1216 = vmatprep.subr.mxu0 0.0
      %1217 = vmatpush1.msra.mxu0 0.0
      %1218 = vmatprep.subr.mxu0 0.0
      %1219 = vmatpush1.msra.mxu0 0.0
      %1220 = vmatprep.subr.mxu0 0.0
      %1221 = vmatpush1.msra.mxu0 0.0
      %1222 = vmatprep.subr.mxu0 0.0
      %1223 = vmatpush1.msra.mxu0 0.0
      %1224 = vmatprep.subr.mxu0 0.0
      %1225 = vmatpush1.msra.mxu0 0.0
      %1226 = vmatprep.subr.mxu0 0.0
      %1227 = vmatpush1.msra.mxu0 0.0
      %1228 = vmatprep.subr.mxu0 0.0
      %1229 = vmatpush1.msra.mxu0 0.0
      %1230 = vmatprep.subr.mxu0 0.0
      %1231 = vmatpush1.msra.mxu0 0.0
      %1232 = vmatprep.subr.mxu0 0.0
      %1233 = vmatpush1.msra.mxu0 0.0
      %1234 = vmatprep.subr.mxu0 0.0
      %1235 = vmatpush1.msra.mxu0 0.0
      %1236 = vmatprep.subr.mxu0 0.0
      %1237 = vmatpush1.msra.mxu0 0.0
      %1238 = vmatprep.subr.mxu0 0.0
      %1239 = vmatpush1.msra.mxu0 0.0
      %1240 = vmatprep.subr.mxu0 0.0
      %1241 = vmatpush1.msra.mxu0 0.0
      %1242 = vmatprep.subr.mxu0 0.0
      %1243 = vmatpush1.msra.mxu0 0.0
      %1244 = vmatprep.subr.mxu0 0.0
      %1245 = vmatpush1.msra.mxu0 0.0
      %1246 = vmatprep.subr.mxu0 0.0
      %1247 = vmatpush1.msra.mxu0 0.0
      %1248 = vmatprep.subr.mxu0 0.0
      %1249 = vmatpush1.msra.mxu0 0.0
      %1250 = vmatprep.subr.mxu0 0.0
      %1251 = vmatpush1.msra.mxu0 0.0
      %1252 = vmatprep.subr.mxu0 0.0
      %1253 = vmatpush1.msra.mxu0 0.0
      %1254 = vmatprep.subr.mxu0 0.0
      %1255 = vmatpush1.msra.mxu0 0.0
      %1256 = vmatprep.mubr.f32.mxu0 0.0
      %1257 = vmatmul.mubr.f32.gmra.mrb[0].mxu0 %v1169
      %v1258 = vpop.f32.mrb[0].mxu0
      %v1259 = vadd.f32 0.0, %v1258
      %v1260 = vpop.f32.mrb[0].mxu0
      %1261 = vmatprep.mubr.f32.mxu0 0.0
      %1262 = vmatmul.mubr.f32.gmra.mrb[0].mxu0 %v1172
      %v1263 = vpop.f32.mrb[0].mxu0
      %v1264 = vadd.f32 0.0, %v1263
      %v1265 = vpop.f32.mrb[0].mxu0
      %1266 = vmatprep.mubr.f32.mxu0 0.0
      %1267 = vmatmul.mubr.f32.gmra.mrb[0].mxu0 %v1175
      %v1268 = vpop.f32.mrb[0].mxu0
      %v1269 = vadd.f32 0.0, %v1268
      %v1270 = vpop.f32.mrb[0].mxu0
      %1271 = vmatprep.mubr.f32.mxu0 0.0
      %1272 = vmatmul.mubr.f32.gmra.mrb[0].mxu0 %v1178
      %v1273 = vpop.f32.mrb[0].mxu0
      %v1274 = vadd.f32 0.0, %v1273
      %v1275 = vpop.f32.mrb[0].mxu0
      %1276 = vmatprep.mubr.f32.mxu0 0.0
      %1277 = vmatmul.mubr.f32.gmra.mrb[0].mxu0 %v1181
      %v1278 = vpop.f32.mrb[0].mxu0
      %v1279 = vadd.f32 0.0, %v1278
      %v1280 = vpop.f32.mrb[0].mxu0
      %1281 = vmatprep.mubr.f32.mxu0 0.0
      %1282 = vmatmul.mubr.f32.gmra.mrb[0].mxu0 %v1184
      %v1283 = vpop.f32.mrb[0].mxu0
      %v1284 = vadd.f32 0.0, %v1283
      %v1285 = vpop.f32.mrb[0].mxu0
      %1286 = vmatprep.mubr.f32.mxu0 0.0
      %1287 = vmatmul.mubr.f32.gmra.mrb[0].mxu0 %v1187
      %v1288 = vpop.f32.mrb[0].mxu0
      %v1289 = vadd.f32 0.0, %v1288
      %v1290 = vpop.f32.mrb[0].mxu0
      %1291 = vmatprep.mubr.f32.mxu0 0.0
      %1292 = vmatmul.mubr.f32.gmra.mrb[0].mxu0 %v1190
      %v1293 = vpop.f32.mrb[0].mxu0
      %v1294 = vadd.f32 0.0, %v1293
      %v1295 = vpop.f32.mrb[0].mxu0
      %1296 = vdwg.mxu0
      %v1298 = vsel %vm257, %v1106, 0
      %v1301 = vsel %vm257, %v1111, 0
      %v1304 = vsel %vm257, %v1116, 0
      %v1307 = vsel %vm257, %v1121, 0
      %v1310 = vsel %vm257, %v1126, 0
      %v1313 = vsel %vm257, %v1131, 0
      %v1316 = vsel %vm257, %v1136, 0
      %v1319 = vsel %vm257, %v1141, 0
      %v1322 = vsel %vm257, %v1259, 0
      %v1325 = vsel %vm257, %v1264, 0
      %v1328 = vsel %vm257, %v1269, 0
      %v1331 = vsel %vm257, %v1274, 0
      %v1334 = vsel %vm257, %v1279, 0
      %v1337 = vsel %vm257, %v1284, 0
      %v1340 = vsel %vm257, %v1289, 0
      %v1343 = vsel %vm257, %v1294, 0
      %1345 = vmatprep.subr.mxu0 0.0
      %1346 = vmatpush1.msra.mxu0 %v451
      %1347 = vmatprep.subr.mxu0 0.0
      %1348 = vmatpush1.msra.mxu0 0.0
      %1349 = vmatprep.subr.mxu0 0.0
      %1350 = vmatpush1.msra.mxu0 0.0
      %1351 = vmatprep.subr.mxu0 0.0
      %1352 = vmatpush1.msra.mxu0 0.0
      %1353 = vmatprep.subr.mxu0 0.0
      %1354 = vmatpush1.msra.mxu0 0.0
      %1355 = vmatprep.subr.mxu0 0.0
      %1356 = vmatpush1.msra.mxu0 0.0
      %1357 = vmatprep.subr.mxu0 0.0
      %1358 = vmatpush1.msra.mxu0 0.0
      %1359 = vmatprep.subr.mxu0 0.0
      %1360 = vmatpush1.msra.mxu0 0.0
      %1361 = vmatprep.subr.mxu0 0.0
      %1362 = vmatpush1.msra.mxu0 0.0
      %1363 = vmatprep.subr.mxu0 0.0
      %1364 = vmatpush1.msra.mxu0 0.0
      %1365 = vmatprep.subr.mxu0 0.0
      %1366 = vmatpush1.msra.mxu0 0.0
      %1367 = vmatprep.subr.mxu0 0.0
      %1368 = vmatpush1.msra.mxu0 0.0
      %1369 = vmatprep.subr.mxu0 0.0
      %1370 = vmatpush1.msra.mxu0 0.0
      %1371 = vmatprep.subr.mxu0 0.0
      %1372 = vmatpush1.msra.mxu0 0.0
      %1373 = vmatprep.subr.mxu0 0.0
      %1374 = vmatpush1.msra.mxu0 0.0
      %1375 = vmatprep.subr.mxu0 0.0
      %1376 = vmatpush1.msra.mxu0 0.0
      %1377 = vmatprep.subr.mxu0 0.0
      %1378 = vmatpush1.msra.mxu0 0.0
      %1379 = vmatprep.subr.mxu0 0.0
      %1380 = vmatpush1.msra.mxu0 0.0
      %1381 = vmatprep.subr.mxu0 0.0
      %1382 = vmatpush1.msra.mxu0 0.0
      %1383 = vmatprep.subr.mxu0 0.0
      %1384 = vmatpush1.msra.mxu0 0.0
      %1385 = vmatprep.subr.mxu0 0.0
      %1386 = vmatpush1.msra.mxu0 0.0
      %1387 = vmatprep.subr.mxu0 0.0
      %1388 = vmatpush1.msra.mxu0 0.0
      %1389 = vmatprep.subr.mxu0 0.0
      %1390 = vmatpush1.msra.mxu0 0.0
      %1391 = vmatprep.subr.mxu0 0.0
      %1392 = vmatpush1.msra.mxu0 0.0
      %1393 = vmatprep.subr.mxu0 0.0
      %1394 = vmatpush1.msra.mxu0 0.0
      %1395 = vmatprep.subr.mxu0 0.0
      %1396 = vmatpush1.msra.mxu0 0.0
      %1397 = vmatprep.subr.mxu0 0.0
      %1398 = vmatpush1.msra.mxu0 0.0
      %1399 = vmatprep.subr.mxu0 0.0
      %1400 = vmatpush1.msra.mxu0 0.0
      %1401 = vmatprep.subr.mxu0 0.0
      %1402 = vmatpush1.msra.mxu0 0.0
      %1403 = vmatprep.subr.mxu0 0.0
      %1404 = vmatpush1.msra.mxu0 0.0
      %1405 = vmatprep.subr.mxu0 0.0
      %1406 = vmatpush1.msra.mxu0 0.0
      %1407 = vmatprep.subr.mxu0 0.0
      %1408 = vmatpush1.msra.mxu0 0.0
      %1409 = vmatprep.mubr.f32.mxu0 0.0
      %1410 = vmatmul.mubr.f32.gmra.mrb[0].mxu0 %v1298
      %v1411 = vpop.f32.mrb[0].mxu0
      %v1412 = vadd.f32 0.0, %v1411
      %v1413 = vpop.f32.mrb[0].mxu0
      %1414 = vmatprep.mubr.f32.mxu0 0.0
      %1415 = vmatmul.mubr.f32.gmra.mrb[0].mxu0 %v1301
      %v1416 = vpop.f32.mrb[0].mxu0
      %v1417 = vadd.f32 0.0, %v1416
      %v1418 = vpop.f32.mrb[0].mxu0
      %1419 = vmatprep.mubr.f32.mxu0 0.0
      %1420 = vmatmul.mubr.f32.gmra.mrb[0].mxu0 %v1304
      %v1421 = vpop.f32.mrb[0].mxu0
      %v1422 = vadd.f32 0.0, %v1421
      %v1423 = vpop.f32.mrb[0].mxu0
      %1424 = vmatprep.mubr.f32.mxu0 0.0
      %1425 = vmatmul.mubr.f32.gmra.mrb[0].mxu0 %v1307
      %v1426 = vpop.f32.mrb[0].mxu0
      %v1427 = vadd.f32 0.0, %v1426
      %v1428 = vpop.f32.mrb[0].mxu0
      %1429 = vmatprep.mubr.f32.mxu0 0.0
      %1430 = vmatmul.mubr.f32.gmra.mrb[0].mxu0 %v1310
      %v1431 = vpop.f32.mrb[0].mxu0
      %v1432 = vadd.f32 0.0, %v1431
      %v1433 = vpop.f32.mrb[0].mxu0
      %1434 = vmatprep.mubr.f32.mxu0 0.0
      %1435 = vmatmul.mubr.f32.gmra.mrb[0].mxu0 %v1313
      %v1436 = vpop.f32.mrb[0].mxu0
      %v1437 = vadd.f32 0.0, %v1436
      %v1438 = vpop.f32.mrb[0].mxu0
      %1439 = vmatprep.mubr.f32.mxu0 0.0
      %1440 = vmatmul.mubr.f32.gmra.mrb[0].mxu0 %v1316
      %v1441 = vpop.f32.mrb[0].mxu0
      %v1442 = vadd.f32 0.0, %v1441
      %v1443 = vpop.f32.mrb[0].mxu0
      %1444 = vmatprep.mubr.f32.mxu0 0.0
      %1445 = vmatmul.mubr.f32.gmra.mrb[0].mxu0 %v1319
      %v1446 = vpop.f32.mrb[0].mxu0
      %v1447 = vadd.f32 0.0, %v1446
      %v1448 = vpop.f32.mrb[0].mxu0
      %1449 = vmatprep.mubr.f32.mxu0 0.0
      %1450 = vmatmul.mubr.f32.gmra.mrb[0].mxu0 %v1322
      %v1451 = vpop.f32.mrb[0].mxu0
      %v1452 = vadd.f32 0.0, %v1451
      %v1453 = vpop.f32.mrb[0].mxu0
      %1454 = vmatprep.mubr.f32.mxu0 0.0
      %1455 = vmatmul.mubr.f32.gmra.mrb[0].mxu0 %v1325
      %v1456 = vpop.f32.mrb[0].mxu0
      %v1457 = vadd.f32 0.0, %v1456
      %v1458 = vpop.f32.mrb[0].mxu0
      %1459 = vmatprep.mubr.f32.mxu0 0.0
      %1460 = vmatmul.mubr.f32.gmra.mrb[0].mxu0 %v1328
      %v1461 = vpop.f32.mrb[0].mxu0
      %v1462 = vadd.f32 0.0, %v1461
      %v1463 = vpop.f32.mrb[0].mxu0
      %1464 = vmatprep.mubr.f32.mxu0 0.0
      %1465 = vmatmul.mubr.f32.gmra.mrb[0].mxu0 %v1331
      %v1466 = vpop.f32.mrb[0].mxu0
      %v1467 = vadd.f32 0.0, %v1466
      %v1468 = vpop.f32.mrb[0].mxu0
      %1469 = vmatprep.mubr.f32.mxu0 0.0
      %1470 = vmatmul.mubr.f32.gmra.mrb[0].mxu0 %v1334
      %v1471 = vpop.f32.mrb[0].mxu0
      %v1472 = vadd.f32 0.0, %v1471
      %v1473 = vpop.f32.mrb[0].mxu0
      %1474 = vmatprep.mubr.f32.mxu0 0.0
      %1475 = vmatmul.mubr.f32.gmra.mrb[0].mxu0 %v1337
      %v1476 = vpop.f32.mrb[0].mxu0
      %v1477 = vadd.f32 0.0, %v1476
      %v1478 = vpop.f32.mrb[0].mxu0
      %1479 = vmatprep.mubr.f32.mxu0 0.0
      %1480 = vmatmul.mubr.f32.gmra.mrb[0].mxu0 %v1340
      %v1481 = vpop.f32.mrb[0].mxu0
      %v1482 = vadd.f32 0.0, %v1481
      %v1483 = vpop.f32.mrb[0].mxu0
      %1484 = vmatprep.mubr.f32.mxu0 0.0
      %1485 = vmatmul.mubr.f32.gmra.mrb[0].mxu0 %v1343
      %v1486 = vpop.f32.mrb[0].mxu0
      %v1487 = vadd.f32 0.0, %v1486
      %v1488 = vpop.f32.mrb[0].mxu0
      %1489 = vdwg.mxu0
      %v1490 = vadd.f32 %v476, %v1412
      %v1491 = vadd.f32 %v477, %v1417
      %v1492 = vadd.f32 %v478, %v1422
      %v1493 = vadd.f32 %v479, %v1427
      %v1494 = vadd.f32 %v480, %v1432
      %v1495 = vadd.f32 %v481, %v1437
      %v1496 = vadd.f32 %v482, %v1442
      %v1497 = vadd.f32 %v483, %v1447
      %v1498 = vadd.f32 %v484, %v1452
      %v1499 = vadd.f32 %v485, %v1457
      %v1500 = vadd.f32 %v486, %v1462
      %v1501 = vadd.f32 %v487, %v1467
      %v1502 = vadd.f32 %v488, %v1472
      %v1503 = vadd.f32 %v489, %v1477
      %v1504 = vadd.f32 %v490, %v1482
      %v1505 = vadd.f32 %v491, %v1487
      %1506 = vrot.lane.b32.xlu0 %v373, 120
      %v1507 = vpop.permute.xlu0 %1506
      %1508 = vrot.lane.b32.xlu0 %v378, 120
      %v1509 = vpop.permute.xlu0 %1508
      %1510 = vrot.lane.b32.xlu0 %v383, 120
      %v1511 = vpop.permute.xlu0 %1510
      %1512 = vrot.lane.b32.xlu0 %v388, 120
      %v1513 = vpop.permute.xlu0 %1512
      %1514 = vrot.lane.b32.xlu0 %v393, 120
      %v1515 = vpop.permute.xlu0 %1514
      %1516 = vrot.lane.b32.xlu0 %v398, 120
      %v1517 = vpop.permute.xlu0 %1516
      %1518 = vrot.lane.b32.xlu0 %v403, 120
      %v1519 = vpop.permute.xlu0 %1518
      %1520 = vrot.lane.b32.xlu0 %v408, 120
      %v1521 = vpop.permute.xlu0 %1520
      %1522 = vrot.lane.b32.xlu0 %v373, 104
      %v1523 = vpop.permute.xlu0 %1522
      %1524 = vrot.lane.b32.xlu0 %v378, 104
      %v1525 = vpop.permute.xlu0 %1524
      %1526 = vrot.lane.b32.xlu0 %v383, 104
      %v1527 = vpop.permute.xlu0 %1526
      %1528 = vrot.lane.b32.xlu0 %v388, 104
      %v1529 = vpop.permute.xlu0 %1528
      %1530 = vrot.lane.b32.xlu0 %v393, 104
      %v1531 = vpop.permute.xlu0 %1530
      %1532 = vrot.lane.b32.xlu0 %v398, 104
      %v1533 = vpop.permute.xlu0 %1532
      %1534 = vrot.lane.b32.xlu0 %v403, 104
      %v1535 = vpop.permute.xlu0 %1534
      %1536 = vrot.lane.b32.xlu0 %v408, 104
      %v1537 = vpop.permute.xlu0 %1536
      %v1538 = vsel %vm257, %v1507, 0
      %v1540 = vsel %vm257, %v1509, 0
      %v1542 = vsel %vm257, %v1511, 0
      %v1544 = vsel %vm257, %v1513, 0
      %v1546 = vsel %vm257, %v1515, 0
      %v1548 = vsel %vm257, %v1517, 0
      %v1550 = vsel %vm257, %v1519, 0
      %v1552 = vsel %vm257, %v1521, 0
      %v1554 = vsel %vm257, %v1523, 0
      %v1556 = vsel %vm257, %v1525, 0
      %v1558 = vsel %vm257, %v1527, 0
      %v1560 = vsel %vm257, %v1529, 0
      %v1562 = vsel %vm257, %v1531, 0
      %v1564 = vsel %vm257, %v1533, 0
      %v1566 = vsel %vm257, %v1535, 0
      %v1568 = vsel %vm257, %v1537, 0
      %1570 = vmatprep.subr.mxu0 0.0
      %1571 = vmatpush1.xpose.msra.mxu0 %v1554
      %1572 = vmatprep.subr.mxu0 0.0
      %1573 = vmatpush1.xpose.msra.mxu0 %v1556
      %1574 = vmatprep.subr.mxu0 0.0
      %1575 = vmatpush1.xpose.msra.mxu0 %v1558
      %1576 = vmatprep.subr.mxu0 0.0
      %1577 = vmatpush1.xpose.msra.mxu0 %v1560
      %1578 = vmatprep.subr.mxu0 0.0
      %1579 = vmatpush1.xpose.msra.mxu0 %v1562
      %1580 = vmatprep.subr.mxu0 0.0
      %1581 = vmatpush1.xpose.msra.mxu0 %v1564
      %1582 = vmatprep.subr.mxu0 0.0
      %1583 = vmatpush1.xpose.msra.mxu0 %v1566
      %1584 = vmatprep.subr.mxu0 0.0
      %1585 = vmatpush1.xpose.msra.mxu0 %v1568
      %1586 = vmatprep.subr.mxu0 0.0
      %1587 = vmatpush1.xpose.msra.mxu0 0.0
      %1588 = vmatprep.subr.mxu0 0.0
      %1589 = vmatpush1.xpose.msra.mxu0 0.0
      %1590 = vmatprep.subr.mxu0 0.0
      %1591 = vmatpush1.xpose.msra.mxu0 0.0
      %1592 = vmatprep.subr.mxu0 0.0
      %1593 = vmatpush1.xpose.msra.mxu0 0.0
      %1594 = vmatprep.subr.mxu0 0.0
      %1595 = vmatpush1.xpose.msra.mxu0 0.0
      %1596 = vmatprep.subr.mxu0 0.0
      %1597 = vmatpush1.xpose.msra.mxu0 0.0
      %1598 = vmatprep.subr.mxu0 0.0
      %1599 = vmatpush1.xpose.msra.mxu0 0.0
      %1600 = vmatprep.subr.mxu0 0.0
      %1601 = vmatpush1.xpose.msra.mxu0 0.0
      %1602 = vmatprep.subr.mxu0 0.0
      %1603 = vmatpush1.xpose.msra.mxu0 0.0
      %1604 = vmatprep.subr.mxu0 0.0
      %1605 = vmatpush1.xpose.msra.mxu0 0.0
      %1606 = vmatprep.subr.mxu0 0.0
      %1607 = vmatpush1.xpose.msra.mxu0 0.0
      %1608 = vmatprep.subr.mxu0 0.0
      %1609 = vmatpush1.xpose.msra.mxu0 0.0
      %1610 = vmatprep.subr.mxu0 0.0
      %1611 = vmatpush1.xpose.msra.mxu0 0.0
      %1612 = vmatprep.subr.mxu0 0.0
      %1613 = vmatpush1.xpose.msra.mxu0 0.0
      %1614 = vmatprep.subr.mxu0 0.0
      %1615 = vmatpush1.xpose.msra.mxu0 0.0
      %1616 = vmatprep.subr.mxu0 0.0
      %1617 = vmatpush1.xpose.msra.mxu0 0.0
      %1618 = vmatprep.subr.mxu0 0.0
      %1619 = vmatpush1.xpose.msra.mxu0 0.0
      %1620 = vmatprep.subr.mxu0 0.0
      %1621 = vmatpush1.xpose.msra.mxu0 0.0
      %1622 = vmatprep.subr.mxu0 0.0
      %1623 = vmatpush1.xpose.msra.mxu0 0.0
      %1624 = vmatprep.subr.mxu0 0.0
      %1625 = vmatpush1.xpose.msra.mxu0 0.0
      %1626 = vmatprep.subr.mxu0 0.0
      %1627 = vmatpush1.xpose.msra.mxu0 0.0
      %1628 = vmatprep.subr.mxu0 0.0
      %1629 = vmatpush1.xpose.msra.mxu0 0.0
      %1630 = vmatprep.subr.mxu0 0.0
      %1631 = vmatpush1.xpose.msra.mxu0 0.0
      %1632 = vmatprep.subr.mxu0 0.0
      %1633 = vmatpush1.xpose.msra.mxu0 0.0
      %1634 = vmatprep.mubr.f32.mxu0 0.0
      %1635 = vmatmul.mubr.f32.gmra.mrb[0].mxu0 %v1538
      %v1636 = vpop.f32.mrb[0].mxu0
      %v1637 = vadd.f32 0.0, %v1636
      %v1638 = vpop.f32.mrb[0].mxu0
      %1639 = vmatprep.mubr.f32.mxu0 0.0
      %1640 = vmatmul.mubr.f32.gmra.mrb[0].mxu0 %v1540
      %v1641 = vpop.f32.mrb[0].mxu0
      %v1642 = vadd.f32 0.0, %v1641
      %v1643 = vpop.f32.mrb[0].mxu0
      %1644 = vmatprep.mubr.f32.mxu0 0.0
      %1645 = vmatmul.mubr.f32.gmra.mrb[0].mxu0 %v1542
      %v1646 = vpop.f32.mrb[0].mxu0
      %v1647 = vadd.f32 0.0, %v1646
      %v1648 = vpop.f32.mrb[0].mxu0
      %1649 = vmatprep.mubr.f32.mxu0 0.0
      %1650 = vmatmul.mubr.f32.gmra.mrb[0].mxu0 %v1544
      %v1651 = vpop.f32.mrb[0].mxu0
      %v1652 = vadd.f32 0.0, %v1651
      %v1653 = vpop.f32.mrb[0].mxu0
      %1654 = vmatprep.mubr.f32.mxu0 0.0
      %1655 = vmatmul.mubr.f32.gmra.mrb[0].mxu0 %v1546
      %v1656 = vpop.f32.mrb[0].mxu0
      %v1657 = vadd.f32 0.0, %v1656
      %v1658 = vpop.f32.mrb[0].mxu0
      %1659 = vmatprep.mubr.f32.mxu0 0.0
      %1660 = vmatmul.mubr.f32.gmra.mrb[0].mxu0 %v1548
      %v1661 = vpop.f32.mrb[0].mxu0
      %v1662 = vadd.f32 0.0, %v1661
      %v1663 = vpop.f32.mrb[0].mxu0
      %1664 = vmatprep.mubr.f32.mxu0 0.0
      %1665 = vmatmul.mubr.f32.gmra.mrb[0].mxu0 %v1550
      %v1666 = vpop.f32.mrb[0].mxu0
      %v1667 = vadd.f32 0.0, %v1666
      %v1668 = vpop.f32.mrb[0].mxu0
      %1669 = vmatprep.mubr.f32.mxu0 0.0
      %1670 = vmatmul.mubr.f32.gmra.mrb[0].mxu0 %v1552
      %v1671 = vpop.f32.mrb[0].mxu0
      %v1672 = vadd.f32 0.0, %v1671
      %v1673 = vpop.f32.mrb[0].mxu0
      %1674 = vdwg.mxu0
      %1675 = vrot.lane.b32.xlu0 %v413, 120
      %v1676 = vpop.permute.xlu0 %1675
      %1677 = vrot.lane.b32.xlu0 %v418, 120
      %v1678 = vpop.permute.xlu0 %1677
      %1679 = vrot.lane.b32.xlu0 %v423, 120
      %v1680 = vpop.permute.xlu0 %1679
      %1681 = vrot.lane.b32.xlu0 %v428, 120
      %v1682 = vpop.permute.xlu0 %1681
      %1683 = vrot.lane.b32.xlu0 %v433, 120
      %v1684 = vpop.permute.xlu0 %1683
      %1685 = vrot.lane.b32.xlu0 %v438, 120
      %v1686 = vpop.permute.xlu0 %1685
      %1687 = vrot.lane.b32.xlu0 %v443, 120
      %v1688 = vpop.permute.xlu0 %1687
      %1689 = vrot.lane.b32.xlu0 %v448, 120
      %v1690 = vpop.permute.xlu0 %1689
      %1691 = vrot.lane.b32.xlu0 %v413, 104
      %v1692 = vpop.permute.xlu0 %1691
      %1693 = vrot.lane.b32.xlu0 %v418, 104
      %v1694 = vpop.permute.xlu0 %1693
      %1695 = vrot.lane.b32.xlu0 %v423, 104
      %v1696 = vpop.permute.xlu0 %1695
      %1697 = vrot.lane.b32.xlu0 %v428, 104
      %v1698 = vpop.permute.xlu0 %1697
      %1699 = vrot.lane.b32.xlu0 %v433, 104
      %v1700 = vpop.permute.xlu0 %1699
      %1701 = vrot.lane.b32.xlu0 %v438, 104
      %v1702 = vpop.permute.xlu0 %1701
      %1703 = vrot.lane.b32.xlu0 %v443, 104
      %v1704 = vpop.permute.xlu0 %1703
      %1705 = vrot.lane.b32.xlu0 %v448, 104
      %v1706 = vpop.permute.xlu0 %1705
      %v1707 = vsel %vm257, %v1676, 0
      %v1709 = vsel %vm257, %v1678, 0
      %v1711 = vsel %vm257, %v1680, 0
      %v1713 = vsel %vm257, %v1682, 0
      %v1715 = vsel %vm257, %v1684, 0
      %v1717 = vsel %vm257, %v1686, 0
      %v1719 = vsel %vm257, %v1688, 0
      %v1721 = vsel %vm257, %v1690, 0
      %v1723 = vsel %vm257, %v1692, 0
      %v1725 = vsel %vm257, %v1694, 0
      %v1727 = vsel %vm257, %v1696, 0
      %v1729 = vsel %vm257, %v1698, 0
      %v1731 = vsel %vm257, %v1700, 0
      %v1733 = vsel %vm257, %v1702, 0
      %v1735 = vsel %vm257, %v1704, 0
      %v1737 = vsel %vm257, %v1706, 0
      %1739 = vmatprep.subr.mxu0 0.0
      %1740 = vmatpush1.xpose.msra.mxu0 %v1723
      %1741 = vmatprep.subr.mxu0 0.0
      %1742 = vmatpush1.xpose.msra.mxu0 %v1725
      %1743 = vmatprep.subr.mxu0 0.0
      %1744 = vmatpush1.xpose.msra.mxu0 %v1727
      %1745 = vmatprep.subr.mxu0 0.0
      %1746 = vmatpush1.xpose.msra.mxu0 %v1729
      %1747 = vmatprep.subr.mxu0 0.0
      %1748 = vmatpush1.xpose.msra.mxu0 %v1731
      %1749 = vmatprep.subr.mxu0 0.0
      %1750 = vmatpush1.xpose.msra.mxu0 %v1733
      %1751 = vmatprep.subr.mxu0 0.0
      %1752 = vmatpush1.xpose.msra.mxu0 %v1735
      %1753 = vmatprep.subr.mxu0 0.0
      %1754 = vmatpush1.xpose.msra.mxu0 %v1737
      %1755 = vmatprep.subr.mxu0 0.0
      %1756 = vmatpush1.xpose.msra.mxu0 0.0
      %1757 = vmatprep.subr.mxu0 0.0
      %1758 = vmatpush1.xpose.msra.mxu0 0.0
      %1759 = vmatprep.subr.mxu0 0.0
      %1760 = vmatpush1.xpose.msra.mxu0 0.0
      %1761 = vmatprep.subr.mxu0 0.0
      %1762 = vmatpush1.xpose.msra.mxu0 0.0
      %1763 = vmatprep.subr.mxu0 0.0
      %1764 = vmatpush1.xpose.msra.mxu0 0.0
      %1765 = vmatprep.subr.mxu0 0.0
      %1766 = vmatpush1.xpose.msra.mxu0 0.0
      %1767 = vmatprep.subr.mxu0 0.0
      %1768 = vmatpush1.xpose.msra.mxu0 0.0
      %1769 = vmatprep.subr.mxu0 0.0
      %1770 = vmatpush1.xpose.msra.mxu0 0.0
      %1771 = vmatprep.subr.mxu0 0.0
      %1772 = vmatpush1.xpose.msra.mxu0 0.0
      %1773 = vmatprep.subr.mxu0 0.0
      %1774 = vmatpush1.xpose.msra.mxu0 0.0
      %1775 = vmatprep.subr.mxu0 0.0
      %1776 = vmatpush1.xpose.msra.mxu0 0.0
      %1777 = vmatprep.subr.mxu0 0.0
      %1778 = vmatpush1.xpose.msra.mxu0 0.0
      %1779 = vmatprep.subr.mxu0 0.0
      %1780 = vmatpush1.xpose.msra.mxu0 0.0
      %1781 = vmatprep.subr.mxu0 0.0
      %1782 = vmatpush1.xpose.msra.mxu0 0.0
      %1783 = vmatprep.subr.mxu0 0.0
      %1784 = vmatpush1.xpose.msra.mxu0 0.0
      %1785 = vmatprep.subr.mxu0 0.0
      %1786 = vmatpush1.xpose.msra.mxu0 0.0
      %1787 = vmatprep.subr.mxu0 0.0
      %1788 = vmatpush1.xpose.msra.mxu0 0.0
      %1789 = vmatprep.subr.mxu0 0.0
      %1790 = vmatpush1.xpose.msra.mxu0 0.0
      %1791 = vmatprep.subr.mxu0 0.0
      %1792 = vmatpush1.xpose.msra.mxu0 0.0
      %1793 = vmatprep.subr.mxu0 0.0
      %1794 = vmatpush1.xpose.msra.mxu0 0.0
      %1795 = vmatprep.subr.mxu0 0.0
      %1796 = vmatpush1.xpose.msra.mxu0 0.0
      %1797 = vmatprep.subr.mxu0 0.0
      %1798 = vmatpush1.xpose.msra.mxu0 0.0
      %1799 = vmatprep.subr.mxu0 0.0
      %1800 = vmatpush1.xpose.msra.mxu0 0.0
      %1801 = vmatprep.subr.mxu0 0.0
      %1802 = vmatpush1.xpose.msra.mxu0 0.0
      %1803 = vmatprep.mubr.f32.mxu0 0.0
      %1804 = vmatmul.mubr.f32.gmra.mrb[0].mxu0 %v1707
      %v1805 = vpop.f32.mrb[0].mxu0
      %v1806 = vadd.f32 0.0, %v1805
      %v1807 = vpop.f32.mrb[0].mxu0
      %1808 = vmatprep.mubr.f32.mxu0 0.0
      %1809 = vmatmul.mubr.f32.gmra.mrb[0].mxu0 %v1709
      %v1810 = vpop.f32.mrb[0].mxu0
      %v1811 = vadd.f32 0.0, %v1810
      %v1812 = vpop.f32.mrb[0].mxu0
      %1813 = vmatprep.mubr.f32.mxu0 0.0
      %1814 = vmatmul.mubr.f32.gmra.mrb[0].mxu0 %v1711
      %v1815 = vpop.f32.mrb[0].mxu0
      %v1816 = vadd.f32 0.0, %v1815
      %v1817 = vpop.f32.mrb[0].mxu0
      %1818 = vmatprep.mubr.f32.mxu0 0.0
      %1819 = vmatmul.mubr.f32.gmra.mrb[0].mxu0 %v1713
      %v1820 = vpop.f32.mrb[0].mxu0
      %v1821 = vadd.f32 0.0, %v1820
      %v1822 = vpop.f32.mrb[0].mxu0
      %1823 = vmatprep.mubr.f32.mxu0 0.0
      %1824 = vmatmul.mubr.f32.gmra.mrb[0].mxu0 %v1715
      %v1825 = vpop.f32.mrb[0].mxu0
      %v1826 = vadd.f32 0.0, %v1825
      %v1827 = vpop.f32.mrb[0].mxu0
      %1828 = vmatprep.mubr.f32.mxu0 0.0
      %1829 = vmatmul.mubr.f32.gmra.mrb[0].mxu0 %v1717
      %v1830 = vpop.f32.mrb[0].mxu0
      %v1831 = vadd.f32 0.0, %v1830
      %v1832 = vpop.f32.mrb[0].mxu0
      %1833 = vmatprep.mubr.f32.mxu0 0.0
      %1834 = vmatmul.mubr.f32.gmra.mrb[0].mxu0 %v1719
      %v1835 = vpop.f32.mrb[0].mxu0
      %v1836 = vadd.f32 0.0, %v1835
      %v1837 = vpop.f32.mrb[0].mxu0
      %1838 = vmatprep.mubr.f32.mxu0 0.0
      %1839 = vmatmul.mubr.f32.gmra.mrb[0].mxu0 %v1721
      %v1840 = vpop.f32.mrb[0].mxu0
      %v1841 = vadd.f32 0.0, %v1840
      %v1842 = vpop.f32.mrb[0].mxu0
      %1843 = vdwg.mxu0
      %v1844 = vsel %vm814, %v1637, -inf
      %1845 = vmax.xlane.f32.xlu0 %v1844
      %v1846 = vpop.xlane.xlu0 %1845
      %v1847 = vsel %vm814, %v1642, -inf
      %1848 = vmax.xlane.f32.xlu0 %v1847
      %v1849 = vpop.xlane.xlu0 %1848
      %v1850 = vsel %vm814, %v1647, -inf
      %1851 = vmax.xlane.f32.xlu0 %v1850
      %v1852 = vpop.xlane.xlu0 %1851
      %v1853 = vsel %vm814, %v1652, -inf
      %1854 = vmax.xlane.f32.xlu0 %v1853
      %v1855 = vpop.xlane.xlu0 %1854
      %v1856 = vsel %vm814, %v1657, -inf
      %1857 = vmax.xlane.f32.xlu0 %v1856
      %v1858 = vpop.xlane.xlu0 %1857
      %v1859 = vsel %vm814, %v1662, -inf
      %1860 = vmax.xlane.f32.xlu0 %v1859
      %v1861 = vpop.xlane.xlu0 %1860
      %v1862 = vsel %vm814, %v1667, -inf
      %1863 = vmax.xlane.f32.xlu0 %v1862
      %v1864 = vpop.xlane.xlu0 %1863
      %v1865 = vsel %vm814, %v1672, -inf
      %1866 = vmax.xlane.f32.xlu0 %v1865
      %v1867 = vpop.xlane.xlu0 %1866
      %v1868 = vsel %vm814, %v1806, -inf
      %1869 = vmax.xlane.f32.xlu0 %v1868
      %v1870 = vpop.xlane.xlu0 %1869
      %v1871 = vsel %vm814, %v1811, -inf
      %1872 = vmax.xlane.f32.xlu0 %v1871
      %v1873 = vpop.xlane.xlu0 %1872
      %v1874 = vsel %vm814, %v1816, -inf
      %1875 = vmax.xlane.f32.xlu0 %v1874
      %v1876 = vpop.xlane.xlu0 %1875
      %v1877 = vsel %vm814, %v1821, -inf
      %1878 = vmax.xlane.f32.xlu0 %v1877
      %v1879 = vpop.xlane.xlu0 %1878
      %v1880 = vsel %vm814, %v1826, -inf
      %1881 = vmax.xlane.f32.xlu0 %v1880
      %v1882 = vpop.xlane.xlu0 %1881
      %v1883 = vsel %vm814, %v1831, -inf
      %1884 = vmax.xlane.f32.xlu0 %v1883
      %v1885 = vpop.xlane.xlu0 %1884
      %v1886 = vsel %vm814, %v1836, -inf
      %1887 = vmax.xlane.f32.xlu0 %v1886
      %v1888 = vpop.xlane.xlu0 %1887
      %v1889 = vsel %vm814, %v1841, -inf
      %1890 = vmax.xlane.f32.xlu0 %v1889
      %v1891 = vpop.xlane.xlu0 %1890
      %v1892 = vsub.f32 %v1637, %v1846
      %v1893 = vsub.f32 %v1642, %v1849
      %v1894 = vsub.f32 %v1647, %v1852
      %v1895 = vsub.f32 %v1652, %v1855
      %v1896 = vsub.f32 %v1657, %v1858
      %v1897 = vsub.f32 %v1662, %v1861
      %v1898 = vsub.f32 %v1667, %v1864
      %v1899 = vsub.f32 %v1672, %v1867
      %v1900 = vsub.f32 %v1806, %v1870
      %v1901 = vsub.f32 %v1811, %v1873
      %v1902 = vsub.f32 %v1816, %v1876
      %v1903 = vsub.f32 %v1821, %v1879
      %v1904 = vsub.f32 %v1826, %v1882
      %v1905 = vsub.f32 %v1831, %v1885
      %v1906 = vsub.f32 %v1836, %v1888
      %v1907 = vsub.f32 %v1841, %v1891
      %v1908 = vmul.f32 %v1892, 1.442695
      %v1909 = vpow.pop %v1908
      %v1910 = vmul.f32 %v1893, 1.442695
      %v1911 = vpow.pop %v1910
      %v1912 = vmul.f32 %v1894, 1.442695
      %v1913 = vpow.pop %v1912
      %v1914 = vmul.f32 %v1895, 1.442695
      %v1915 = vpow.pop %v1914
      %v1916 = vmul.f32 %v1896, 1.442695
      %v1917 = vpow.pop %v1916
      %v1918 = vmul.f32 %v1897, 1.442695
      %v1919 = vpow.pop %v1918
      %v1920 = vmul.f32 %v1898, 1.442695
      %v1921 = vpow.pop %v1920
      %v1922 = vmul.f32 %v1899, 1.442695
      %v1923 = vpow.pop %v1922
      %v1924 = vmul.f32 %v1900, 1.442695
      %v1925 = vpow.pop %v1924
      %v1926 = vmul.f32 %v1901, 1.442695
      %v1927 = vpow.pop %v1926
      %v1928 = vmul.f32 %v1902, 1.442695
      %v1929 = vpow.pop %v1928
      %v1930 = vmul.f32 %v1903, 1.442695
      %v1931 = vpow.pop %v1930
      %v1932 = vmul.f32 %v1904, 1.442695
      %v1933 = vpow.pop %v1932
      %v1934 = vmul.f32 %v1905, 1.442695
      %v1935 = vpow.pop %v1934
      %v1936 = vmul.f32 %v1906, 1.442695
      %v1937 = vpow.pop %v1936
      %v1938 = vmul.f32 %v1907, 1.442695
      %v1939 = vpow.pop %v1938
      %v1940 = vsel %vm814, %v1909, 0.0
      %1941 = vadd.xlane.f32.xlu0 %v1940
      %v1942 = vpop.xlane.xlu0 %1941
      %v1943 = vsel %vm814, %v1911, 0.0
      %1944 = vadd.xlane.f32.xlu0 %v1943
      %v1945 = vpop.xlane.xlu0 %1944
      %v1946 = vsel %vm814, %v1913, 0.0
      %1947 = vadd.xlane.f32.xlu0 %v1946
      %v1948 = vpop.xlane.xlu0 %1947
      %v1949 = vsel %vm814, %v1915, 0.0
      %1950 = vadd.xlane.f32.xlu0 %v1949
      %v1951 = vpop.xlane.xlu0 %1950
      %v1952 = vsel %vm814, %v1917, 0.0
      %1953 = vadd.xlane.f32.xlu0 %v1952
      %v1954 = vpop.xlane.xlu0 %1953
      %v1955 = vsel %vm814, %v1919, 0.0
      %1956 = vadd.xlane.f32.xlu0 %v1955
      %v1957 = vpop.xlane.xlu0 %1956
      %v1958 = vsel %vm814, %v1921, 0.0
      %1959 = vadd.xlane.f32.xlu0 %v1958
      %v1960 = vpop.xlane.xlu0 %1959
      %v1961 = vsel %vm814, %v1923, 0.0
      %1962 = vadd.xlane.f32.xlu0 %v1961
      %v1963 = vpop.xlane.xlu0 %1962
      %v1964 = vsel %vm814, %v1925, 0.0
      %1965 = vadd.xlane.f32.xlu0 %v1964
      %v1966 = vpop.xlane.xlu0 %1965
      %v1967 = vsel %vm814, %v1927, 0.0
      %1968 = vadd.xlane.f32.xlu0 %v1967
      %v1969 = vpop.xlane.xlu0 %1968
      %v1970 = vsel %vm814, %v1929, 0.0
      %1971 = vadd.xlane.f32.xlu0 %v1970
      %v1972 = vpop.xlane.xlu0 %1971
      %v1973 = vsel %vm814, %v1931, 0.0
      %1974 = vadd.xlane.f32.xlu0 %v1973
      %v1975 = vpop.xlane.xlu0 %1974
      %v1976 = vsel %vm814, %v1933, 0.0
      %1977 = vadd.xlane.f32.xlu0 %v1976
      %v1978 = vpop.xlane.xlu0 %1977
      %v1979 = vsel %vm814, %v1935, 0.0
      %1980 = vadd.xlane.f32.xlu0 %v1979
      %v1981 = vpop.xlane.xlu0 %1980
      %v1982 = vsel %vm814, %v1937, 0.0
      %1983 = vadd.xlane.f32.xlu0 %v1982
      %v1984 = vpop.xlane.xlu0 %1983
      %v1985 = vsel %vm814, %v1939, 0.0
      %1986 = vadd.xlane.f32.xlu0 %v1985
      %v1987 = vpop.xlane.xlu0 %1986
      %v1988 = vrcp.pop %v1942
      %v1989 = vrcp.pop %v1945
      %v1990 = vrcp.pop %v1948
      %v1991 = vrcp.pop %v1951
      %v1992 = vrcp.pop %v1954
      %v1993 = vrcp.pop %v1957
      %v1994 = vrcp.pop %v1960
      %v1995 = vrcp.pop %v1963
      %v1996 = vrcp.pop %v1966
      %v1997 = vrcp.pop %v1969
      %v1998 = vrcp.pop %v1972
      %v1999 = vrcp.pop %v1975
      %v2000 = vrcp.pop %v1978
      %v2001 = vrcp.pop %v1981
      %v2002 = vrcp.pop %v1984
      %v2003 = vrcp.pop %v1987
      %v2004 = vmul.f32 %v1909, %v1988
      %v2005 = vmul.f32 %v1911, %v1989
      %v2006 = vmul.f32 %v1913, %v1990
      %v2007 = vmul.f32 %v1915, %v1991
      %v2008 = vmul.f32 %v1917, %v1992
      %v2009 = vmul.f32 %v1919, %v1993
      %v2010 = vmul.f32 %v1921, %v1994
      %v2011 = vmul.f32 %v1923, %v1995
      %v2012 = vmul.f32 %v1925, %v1996
      %v2013 = vmul.f32 %v1927, %v1997
      %v2014 = vmul.f32 %v1929, %v1998
      %v2015 = vmul.f32 %v1931, %v1999
      %v2016 = vmul.f32 %v1933, %v2000
      %v2017 = vmul.f32 %v1935, %v2001
      %v2018 = vmul.f32 %v1937, %v2002
      %v2019 = vmul.f32 %v1939, %v2003
      %2020 = vrot.lane.b32.xlu0 %v373, 88
      %v2021 = vpop.permute.xlu0 %2020
      %2022 = vrot.lane.b32.xlu0 %v378, 88
      %v2023 = vpop.permute.xlu0 %2022
      %2024 = vrot.lane.b32.xlu0 %v383, 88
      %v2025 = vpop.permute.xlu0 %2024
      %2026 = vrot.lane.b32.xlu0 %v388, 88
      %v2027 = vpop.permute.xlu0 %2026
      %2028 = vrot.lane.b32.xlu0 %v393, 88
      %v2029 = vpop.permute.xlu0 %2028
      %2030 = vrot.lane.b32.xlu0 %v398, 88
      %v2031 = vpop.permute.xlu0 %2030
      %2032 = vrot.lane.b32.xlu0 %v403, 88
      %v2033 = vpop.permute.xlu0 %2032
      %2034 = vrot.lane.b32.xlu0 %v408, 88
      %v2035 = vpop.permute.xlu0 %2034
      %v2045 = vsel %vm814, %v2004, 0
      %v2048 = vsel %vm814, %v2005, 0
      %v2051 = vsel %vm814, %v2006, 0
      %v2054 = vsel %vm814, %v2007, 0
      %v2057 = vsel %vm814, %v2008, 0
      %v2060 = vsel %vm814, %v2009, 0
      %v2063 = vsel %vm814, %v2010, 0
      %v2066 = vsel %vm814, %v2011, 0
      %2068 = vmatprep.subr.mxu0 0.0
      %2069 = vmatpush1.msra.mxu0 %v2021
      %2070 = vmatprep.subr.mxu0 0.0
      %2071 = vmatpush1.msra.mxu0 %v2023
      %2072 = vmatprep.subr.mxu0 0.0
      %2073 = vmatpush1.msra.mxu0 %v2025
      %2074 = vmatprep.subr.mxu0 0.0
      %2075 = vmatpush1.msra.mxu0 %v2027
      %2076 = vmatprep.subr.mxu0 0.0
      %2077 = vmatpush1.msra.mxu0 %v2029
      %2078 = vmatprep.subr.mxu0 0.0
      %2079 = vmatpush1.msra.mxu0 %v2031
      %2080 = vmatprep.subr.mxu0 0.0
      %2081 = vmatpush1.msra.mxu0 %v2033
      %2082 = vmatprep.subr.mxu0 0.0
      %2083 = vmatpush1.msra.mxu0 %v2035
      %2084 = vmatprep.subr.mxu0 0.0
      %2085 = vmatpush1.msra.mxu0 0.0
      %2086 = vmatprep.subr.mxu0 0.0
      %2087 = vmatpush1.msra.mxu0 0.0
      %2088 = vmatprep.subr.mxu0 0.0
      %2089 = vmatpush1.msra.mxu0 0.0
      %2090 = vmatprep.subr.mxu0 0.0
      %2091 = vmatpush1.msra.mxu0 0.0
      %2092 = vmatprep.subr.mxu0 0.0
      %2093 = vmatpush1.msra.mxu0 0.0
      %2094 = vmatprep.subr.mxu0 0.0
      %2095 = vmatpush1.msra.mxu0 0.0
      %2096 = vmatprep.subr.mxu0 0.0
      %2097 = vmatpush1.msra.mxu0 0.0
      %2098 = vmatprep.subr.mxu0 0.0
      %2099 = vmatpush1.msra.mxu0 0.0
      %2100 = vmatprep.subr.mxu0 0.0
      %2101 = vmatpush1.msra.mxu0 0.0
      %2102 = vmatprep.subr.mxu0 0.0
      %2103 = vmatpush1.msra.mxu0 0.0
      %2104 = vmatprep.subr.mxu0 0.0
      %2105 = vmatpush1.msra.mxu0 0.0
      %2106 = vmatprep.subr.mxu0 0.0
      %2107 = vmatpush1.msra.mxu0 0.0
      %2108 = vmatprep.subr.mxu0 0.0
      %2109 = vmatpush1.msra.mxu0 0.0
      %2110 = vmatprep.subr.mxu0 0.0
      %2111 = vmatpush1.msra.mxu0 0.0
      %2112 = vmatprep.subr.mxu0 0.0
      %2113 = vmatpush1.msra.mxu0 0.0
      %2114 = vmatprep.subr.mxu0 0.0
      %2115 = vmatpush1.msra.mxu0 0.0
      %2116 = vmatprep.subr.mxu0 0.0
      %2117 = vmatpush1.msra.mxu0 0.0
      %2118 = vmatprep.subr.mxu0 0.0
      %2119 = vmatpush1.msra.mxu0 0.0
      %2120 = vmatprep.subr.mxu0 0.0
      %2121 = vmatpush1.msra.mxu0 0.0
      %2122 = vmatprep.subr.mxu0 0.0
      %2123 = vmatpush1.msra.mxu0 0.0
      %2124 = vmatprep.subr.mxu0 0.0
      %2125 = vmatpush1.msra.mxu0 0.0
      %2126 = vmatprep.subr.mxu0 0.0
      %2127 = vmatpush1.msra.mxu0 0.0
      %2128 = vmatprep.subr.mxu0 0.0
      %2129 = vmatpush1.msra.mxu0 0.0
      %2130 = vmatprep.subr.mxu0 0.0
      %2131 = vmatpush1.msra.mxu0 0.0
      %2132 = vmatprep.mubr.f32.mxu0 0.0
      %2133 = vmatmul.mubr.f32.gmra.mrb[0].mxu0 %v2045
      %v2134 = vpop.f32.mrb[0].mxu0
      %v2135 = vadd.f32 0.0, %v2134
      %v2136 = vpop.f32.mrb[0].mxu0
      %2137 = vmatprep.mubr.f32.mxu0 0.0
      %2138 = vmatmul.mubr.f32.gmra.mrb[0].mxu0 %v2048
      %v2139 = vpop.f32.mrb[0].mxu0
      %v2140 = vadd.f32 0.0, %v2139
      %v2141 = vpop.f32.mrb[0].mxu0
      %2142 = vmatprep.mubr.f32.mxu0 0.0
      %2143 = vmatmul.mubr.f32.gmra.mrb[0].mxu0 %v2051
      %v2144 = vpop.f32.mrb[0].mxu0
      %v2145 = vadd.f32 0.0, %v2144
      %v2146 = vpop.f32.mrb[0].mxu0
      %2147 = vmatprep.mubr.f32.mxu0 0.0
      %2148 = vmatmul.mubr.f32.gmra.mrb[0].mxu0 %v2054
      %v2149 = vpop.f32.mrb[0].mxu0
      %v2150 = vadd.f32 0.0, %v2149
      %v2151 = vpop.f32.mrb[0].mxu0
      %2152 = vmatprep.mubr.f32.mxu0 0.0
      %2153 = vmatmul.mubr.f32.gmra.mrb[0].mxu0 %v2057
      %v2154 = vpop.f32.mrb[0].mxu0
      %v2155 = vadd.f32 0.0, %v2154
      %v2156 = vpop.f32.mrb[0].mxu0
      %2157 = vmatprep.mubr.f32.mxu0 0.0
      %2158 = vmatmul.mubr.f32.gmra.mrb[0].mxu0 %v2060
      %v2159 = vpop.f32.mrb[0].mxu0
      %v2160 = vadd.f32 0.0, %v2159
      %v2161 = vpop.f32.mrb[0].mxu0
      %2162 = vmatprep.mubr.f32.mxu0 0.0
      %2163 = vmatmul.mubr.f32.gmra.mrb[0].mxu0 %v2063
      %v2164 = vpop.f32.mrb[0].mxu0
      %v2165 = vadd.f32 0.0, %v2164
      %v2166 = vpop.f32.mrb[0].mxu0
      %2167 = vmatprep.mubr.f32.mxu0 0.0
      %2168 = vmatmul.mubr.f32.gmra.mrb[0].mxu0 %v2066
      %v2169 = vpop.f32.mrb[0].mxu0
      %v2170 = vadd.f32 0.0, %v2169
      %v2171 = vpop.f32.mrb[0].mxu0
      %2172 = vdwg.mxu0
      %2173 = vrot.lane.b32.xlu0 %v413, 88
      %v2174 = vpop.permute.xlu0 %2173
      %2175 = vrot.lane.b32.xlu0 %v418, 88
      %v2176 = vpop.permute.xlu0 %2175
      %2177 = vrot.lane.b32.xlu0 %v423, 88
      %v2178 = vpop.permute.xlu0 %2177
      %2179 = vrot.lane.b32.xlu0 %v428, 88
      %v2180 = vpop.permute.xlu0 %2179
      %2181 = vrot.lane.b32.xlu0 %v433, 88
      %v2182 = vpop.permute.xlu0 %2181
      %2183 = vrot.lane.b32.xlu0 %v438, 88
      %v2184 = vpop.permute.xlu0 %2183
      %2185 = vrot.lane.b32.xlu0 %v443, 88
      %v2186 = vpop.permute.xlu0 %2185
      %2187 = vrot.lane.b32.xlu0 %v448, 88
      %v2188 = vpop.permute.xlu0 %2187
      %v2198 = vsel %vm814, %v2012, 0
      %v2201 = vsel %vm814, %v2013, 0
      %v2204 = vsel %vm814, %v2014, 0
      %v2207 = vsel %vm814, %v2015, 0
      %v2210 = vsel %vm814, %v2016, 0
      %v2213 = vsel %vm814, %v2017, 0
      %v2216 = vsel %vm814, %v2018, 0
      %v2219 = vsel %vm814, %v2019, 0
      %2221 = vmatprep.subr.mxu0 0.0
      %2222 = vmatpush1.msra.mxu0 %v2174
      %2223 = vmatprep.subr.mxu0 0.0
      %2224 = vmatpush1.msra.mxu0 %v2176
      %2225 = vmatprep.subr.mxu0 0.0
      %2226 = vmatpush1.msra.mxu0 %v2178
      %2227 = vmatprep.subr.mxu0 0.0
      %2228 = vmatpush1.msra.mxu0 %v2180
      %2229 = vmatprep.subr.mxu0 0.0
      %2230 = vmatpush1.msra.mxu0 %v2182
      %2231 = vmatprep.subr.mxu0 0.0
      %2232 = vmatpush1.msra.mxu0 %v2184
      %2233 = vmatprep.subr.mxu0 0.0
      %2234 = vmatpush1.msra.mxu0 %v2186
      %2235 = vmatprep.subr.mxu0 0.0
      %2236 = vmatpush1.msra.mxu0 %v2188
      %2237 = vmatprep.subr.mxu0 0.0
      %2238 = vmatpush1.msra.mxu0 0.0
      %2239 = vmatprep.subr.mxu0 0.0
      %2240 = vmatpush1.msra.mxu0 0.0
      %2241 = vmatprep.subr.mxu0 0.0
      %2242 = vmatpush1.msra.mxu0 0.0
      %2243 = vmatprep.subr.mxu0 0.0
      %2244 = vmatpush1.msra.mxu0 0.0
      %2245 = vmatprep.subr.mxu0 0.0
      %2246 = vmatpush1.msra.mxu0 0.0
      %2247 = vmatprep.subr.mxu0 0.0
      %2248 = vmatpush1.msra.mxu0 0.0
      %2249 = vmatprep.subr.mxu0 0.0
      %2250 = vmatpush1.msra.mxu0 0.0
      %2251 = vmatprep.subr.mxu0 0.0
      %2252 = vmatpush1.msra.mxu0 0.0
      %2253 = vmatprep.subr.mxu0 0.0
      %2254 = vmatpush1.msra.mxu0 0.0
      %2255 = vmatprep.subr.mxu0 0.0
      %2256 = vmatpush1.msra.mxu0 0.0
      %2257 = vmatprep.subr.mxu0 0.0
      %2258 = vmatpush1.msra.mxu0 0.0
      %2259 = vmatprep.subr.mxu0 0.0
      %2260 = vmatpush1.msra.mxu0 0.0
      %2261 = vmatprep.subr.mxu0 0.0
      %2262 = vmatpush1.msra.mxu0 0.0
      %2263 = vmatprep.subr.mxu0 0.0
      %2264 = vmatpush1.msra.mxu0 0.0
      %2265 = vmatprep.subr.mxu0 0.0
      %2266 = vmatpush1.msra.mxu0 0.0
      %2267 = vmatprep.subr.mxu0 0.0
      %2268 = vmatpush1.msra.mxu0 0.0
      %2269 = vmatprep.subr.mxu0 0.0
      %2270 = vmatpush1.msra.mxu0 0.0
      %2271 = vmatprep.subr.mxu0 0.0
      %2272 = vmatpush1.msra.mxu0 0.0
      %2273 = vmatprep.subr.mxu0 0.0
      %2274 = vmatpush1.msra.mxu0 0.0
      %2275 = vmatprep.subr.mxu0 0.0
      %2276 = vmatpush1.msra.mxu0 0.0
      %2277 = vmatprep.subr.mxu0 0.0
      %2278 = vmatpush1.msra.mxu0 0.0
      %2279 = vmatprep.subr.mxu0 0.0
      %2280 = vmatpush1.msra.mxu0 0.0
      %2281 = vmatprep.subr.mxu0 0.0
      %2282 = vmatpush1.msra.mxu0 0.0
      %2283 = vmatprep.subr.mxu0 0.0
      %2284 = vmatpush1.msra.mxu0 0.0
      %2285 = vmatprep.mubr.f32.mxu0 0.0
      %2286 = vmatmul.mubr.f32.gmra.mrb[0].mxu0 %v2198
      %v2287 = vpop.f32.mrb[0].mxu0
      %v2288 = vadd.f32 0.0, %v2287
      %v2289 = vpop.f32.mrb[0].mxu0
      %2290 = vmatprep.mubr.f32.mxu0 0.0
      %2291 = vmatmul.mubr.f32.gmra.mrb[0].mxu0 %v2201
      %v2292 = vpop.f32.mrb[0].mxu0
      %v2293 = vadd.f32 0.0, %v2292
      %v2294 = vpop.f32.mrb[0].mxu0
      %2295 = vmatprep.mubr.f32.mxu0 0.0
      %2296 = vmatmul.mubr.f32.gmra.mrb[0].mxu0 %v2204
      %v2297 = vpop.f32.mrb[0].mxu0
      %v2298 = vadd.f32 0.0, %v2297
      %v2299 = vpop.f32.mrb[0].mxu0
      %2300 = vmatprep.mubr.f32.mxu0 0.0
      %2301 = vmatmul.mubr.f32.gmra.mrb[0].mxu0 %v2207
      %v2302 = vpop.f32.mrb[0].mxu0
      %v2303 = vadd.f32 0.0, %v2302
      %v2304 = vpop.f32.mrb[0].mxu0
      %2305 = vmatprep.mubr.f32.mxu0 0.0
      %2306 = vmatmul.mubr.f32.gmra.mrb[0].mxu0 %v2210
      %v2307 = vpop.f32.mrb[0].mxu0
      %v2308 = vadd.f32 0.0, %v2307
      %v2309 = vpop.f32.mrb[0].mxu0
      %2310 = vmatprep.mubr.f32.mxu0 0.0
      %2311 = vmatmul.mubr.f32.gmra.mrb[0].mxu0 %v2213
      %v2312 = vpop.f32.mrb[0].mxu0
      %v2313 = vadd.f32 0.0, %v2312
      %v2314 = vpop.f32.mrb[0].mxu0
      %2315 = vmatprep.mubr.f32.mxu0 0.0
      %2316 = vmatmul.mubr.f32.gmra.mrb[0].mxu0 %v2216
      %v2317 = vpop.f32.mrb[0].mxu0
      %v2318 = vadd.f32 0.0, %v2317
      %v2319 = vpop.f32.mrb[0].mxu0
      %2320 = vmatprep.mubr.f32.mxu0 0.0
      %2321 = vmatmul.mubr.f32.gmra.mrb[0].mxu0 %v2219
      %v2322 = vpop.f32.mrb[0].mxu0
      %v2323 = vadd.f32 0.0, %v2322
      %v2324 = vpop.f32.mrb[0].mxu0
      %2325 = vdwg.mxu0
      %v2327 = vsel %vm257, %v2135, 0
      %v2330 = vsel %vm257, %v2140, 0
      %v2333 = vsel %vm257, %v2145, 0
      %v2336 = vsel %vm257, %v2150, 0
      %v2339 = vsel %vm257, %v2155, 0
      %v2342 = vsel %vm257, %v2160, 0
      %v2345 = vsel %vm257, %v2165, 0
      %v2348 = vsel %vm257, %v2170, 0
      %v2351 = vsel %vm257, %v2288, 0
      %v2354 = vsel %vm257, %v2293, 0
      %v2357 = vsel %vm257, %v2298, 0
      %v2360 = vsel %vm257, %v2303, 0
      %v2363 = vsel %vm257, %v2308, 0
      %v2366 = vsel %vm257, %v2313, 0
      %v2369 = vsel %vm257, %v2318, 0
      %v2372 = vsel %vm257, %v2323, 0
      %2374 = vmatprep.subr.mxu0 0.0
      %2375 = vmatpush1.msra.mxu0 %v452
      %2376 = vmatprep.subr.mxu0 0.0
      %2377 = vmatpush1.msra.mxu0 0.0
      %2378 = vmatprep.subr.mxu0 0.0
      %2379 = vmatpush1.msra.mxu0 0.0
      %2380 = vmatprep.subr.mxu0 0.0
      %2381 = vmatpush1.msra.mxu0 0.0
      %2382 = vmatprep.subr.mxu0 0.0
      %2383 = vmatpush1.msra.mxu0 0.0
      %2384 = vmatprep.subr.mxu0 0.0
      %2385 = vmatpush1.msra.mxu0 0.0
      %2386 = vmatprep.subr.mxu0 0.0
      %2387 = vmatpush1.msra.mxu0 0.0
      %2388 = vmatprep.subr.mxu0 0.0
      %2389 = vmatpush1.msra.mxu0 0.0
      %2390 = vmatprep.subr.mxu0 0.0
      %2391 = vmatpush1.msra.mxu0 0.0
      %2392 = vmatprep.subr.mxu0 0.0
      %2393 = vmatpush1.msra.mxu0 0.0
      %2394 = vmatprep.subr.mxu0 0.0
      %2395 = vmatpush1.msra.mxu0 0.0
      %2396 = vmatprep.subr.mxu0 0.0
      %2397 = vmatpush1.msra.mxu0 0.0
      %2398 = vmatprep.subr.mxu0 0.0
      %2399 = vmatpush1.msra.mxu0 0.0
      %2400 = vmatprep.subr.mxu0 0.0
      %2401 = vmatpush1.msra.mxu0 0.0
      %2402 = vmatprep.subr.mxu0 0.0
      %2403 = vmatpush1.msra.mxu0 0.0
      %2404 = vmatprep.subr.mxu0 0.0
      %2405 = vmatpush1.msra.mxu0 0.0
      %2406 = vmatprep.subr.mxu0 0.0
      %2407 = vmatpush1.msra.mxu0 0.0
      %2408 = vmatprep.subr.mxu0 0.0
      %2409 = vmatpush1.msra.mxu0 0.0
      %2410 = vmatprep.subr.mxu0 0.0
      %2411 = vmatpush1.msra.mxu0 0.0
      %2412 = vmatprep.subr.mxu0 0.0
      %2413 = vmatpush1.msra.mxu0 0.0
      %2414 = vmatprep.subr.mxu0 0.0
      %2415 = vmatpush1.msra.mxu0 0.0
      %2416 = vmatprep.subr.mxu0 0.0
      %2417 = vmatpush1.msra.mxu0 0.0
      %2418 = vmatprep.subr.mxu0 0.0
      %2419 = vmatpush1.msra.mxu0 0.0
      %2420 = vmatprep.subr.mxu0 0.0
      %2421 = vmatpush1.msra.mxu0 0.0
      %2422 = vmatprep.subr.mxu0 0.0
      %2423 = vmatpush1.msra.mxu0 0.0
      %2424 = vmatprep.subr.mxu0 0.0
      %2425 = vmatpush1.msra.mxu0 0.0
      %2426 = vmatprep.subr.mxu0 0.0
      %2427 = vmatpush1.msra.mxu0 0.0
      %2428 = vmatprep.subr.mxu0 0.0
      %2429 = vmatpush1.msra.mxu0 0.0
      %2430 = vmatprep.subr.mxu0 0.0
      %2431 = vmatpush1.msra.mxu0 0.0
      %2432 = vmatprep.subr.mxu0 0.0
      %2433 = vmatpush1.msra.mxu0 0.0
      %2434 = vmatprep.subr.mxu0 0.0
      %2435 = vmatpush1.msra.mxu0 0.0
      %2436 = vmatprep.subr.mxu0 0.0
      %2437 = vmatpush1.msra.mxu0 0.0
      %2438 = vmatprep.mubr.f32.mxu0 0.0
      %2439 = vmatmul.mubr.f32.gmra.mrb[0].mxu0 %v2327
      %v2440 = vpop.f32.mrb[0].mxu0
      %v2441 = vadd.f32 0.0, %v2440
      %v2442 = vpop.f32.mrb[0].mxu0
      %2443 = vmatprep.mubr.f32.mxu0 0.0
      %2444 = vmatmul.mubr.f32.gmra.mrb[0].mxu0 %v2330
      %v2445 = vpop.f32.mrb[0].mxu0
      %v2446 = vadd.f32 0.0, %v2445
      %v2447 = vpop.f32.mrb[0].mxu0
      %2448 = vmatprep.mubr.f32.mxu0 0.0
      %2449 = vmatmul.mubr.f32.gmra.mrb[0].mxu0 %v2333
      %v2450 = vpop.f32.mrb[0].mxu0
      %v2451 = vadd.f32 0.0, %v2450
      %v2452 = vpop.f32.mrb[0].mxu0
      %2453 = vmatprep.mubr.f32.mxu0 0.0
      %2454 = vmatmul.mubr.f32.gmra.mrb[0].mxu0 %v2336
      %v2455 = vpop.f32.mrb[0].mxu0
      %v2456 = vadd.f32 0.0, %v2455
      %v2457 = vpop.f32.mrb[0].mxu0
      %2458 = vmatprep.mubr.f32.mxu0 0.0
      %2459 = vmatmul.mubr.f32.gmra.mrb[0].mxu0 %v2339
      %v2460 = vpop.f32.mrb[0].mxu0
      %v2461 = vadd.f32 0.0, %v2460
      %v2462 = vpop.f32.mrb[0].mxu0
      %2463 = vmatprep.mubr.f32.mxu0 0.0
      %2464 = vmatmul.mubr.f32.gmra.mrb[0].mxu0 %v2342
      %v2465 = vpop.f32.mrb[0].mxu0
      %v2466 = vadd.f32 0.0, %v2465
      %v2467 = vpop.f32.mrb[0].mxu0
      %2468 = vmatprep.mubr.f32.mxu0 0.0
      %2469 = vmatmul.mubr.f32.gmra.mrb[0].mxu0 %v2345
      %v2470 = vpop.f32.mrb[0].mxu0
      %v2471 = vadd.f32 0.0, %v2470
      %v2472 = vpop.f32.mrb[0].mxu0
      %2473 = vmatprep.mubr.f32.mxu0 0.0
      %2474 = vmatmul.mubr.f32.gmra.mrb[0].mxu0 %v2348
      %v2475 = vpop.f32.mrb[0].mxu0
      %v2476 = vadd.f32 0.0, %v2475
      %v2477 = vpop.f32.mrb[0].mxu0
      %2478 = vmatprep.mubr.f32.mxu0 0.0
      %2479 = vmatmul.mubr.f32.gmra.mrb[0].mxu0 %v2351
      %v2480 = vpop.f32.mrb[0].mxu0
      %v2481 = vadd.f32 0.0, %v2480
      %v2482 = vpop.f32.mrb[0].mxu0
      %2483 = vmatprep.mubr.f32.mxu0 0.0
      %2484 = vmatmul.mubr.f32.gmra.mrb[0].mxu0 %v2354
      %v2485 = vpop.f32.mrb[0].mxu0
      %v2486 = vadd.f32 0.0, %v2485
      %v2487 = vpop.f32.mrb[0].mxu0
      %2488 = vmatprep.mubr.f32.mxu0 0.0
      %2489 = vmatmul.mubr.f32.gmra.mrb[0].mxu0 %v2357
      %v2490 = vpop.f32.mrb[0].mxu0
      %v2491 = vadd.f32 0.0, %v2490
      %v2492 = vpop.f32.mrb[0].mxu0
      %2493 = vmatprep.mubr.f32.mxu0 0.0
      %2494 = vmatmul.mubr.f32.gmra.mrb[0].mxu0 %v2360
      %v2495 = vpop.f32.mrb[0].mxu0
      %v2496 = vadd.f32 0.0, %v2495
      %v2497 = vpop.f32.mrb[0].mxu0
      %2498 = vmatprep.mubr.f32.mxu0 0.0
      %2499 = vmatmul.mubr.f32.gmra.mrb[0].mxu0 %v2363
      %v2500 = vpop.f32.mrb[0].mxu0
      %v2501 = vadd.f32 0.0, %v2500
      %v2502 = vpop.f32.mrb[0].mxu0
      %2503 = vmatprep.mubr.f32.mxu0 0.0
      %2504 = vmatmul.mubr.f32.gmra.mrb[0].mxu0 %v2366
      %v2505 = vpop.f32.mrb[0].mxu0
      %v2506 = vadd.f32 0.0, %v2505
      %v2507 = vpop.f32.mrb[0].mxu0
      %2508 = vmatprep.mubr.f32.mxu0 0.0
      %2509 = vmatmul.mubr.f32.gmra.mrb[0].mxu0 %v2369
      %v2510 = vpop.f32.mrb[0].mxu0
      %v2511 = vadd.f32 0.0, %v2510
      %v2512 = vpop.f32.mrb[0].mxu0
      %2513 = vmatprep.mubr.f32.mxu0 0.0
      %2514 = vmatmul.mubr.f32.gmra.mrb[0].mxu0 %v2372
      %v2515 = vpop.f32.mrb[0].mxu0
      %v2516 = vadd.f32 0.0, %v2515
      %v2517 = vpop.f32.mrb[0].mxu0
      %2518 = vdwg.mxu0
      %v2519 = vadd.f32 %v1490, %v2441
      %v2520 = vadd.f32 %v1491, %v2446
      %v2521 = vadd.f32 %v1492, %v2451
      %v2522 = vadd.f32 %v1493, %v2456
      %v2523 = vadd.f32 %v1494, %v2461
      %v2524 = vadd.f32 %v1495, %v2466
      %v2525 = vadd.f32 %v1496, %v2471
      %v2526 = vadd.f32 %v1497, %v2476
      %v2527 = vadd.f32 %v1498, %v2481
      %v2528 = vadd.f32 %v1499, %v2486
      %v2529 = vadd.f32 %v1500, %v2491
      %v2530 = vadd.f32 %v1501, %v2496
      %v2531 = vadd.f32 %v1502, %v2501
      %v2532 = vadd.f32 %v1503, %v2506
      %v2533 = vadd.f32 %v1504, %v2511
      %v2534 = vadd.f32 %v1505, %v2516
      %2535 = vst.msk [vmem:[%s231] sm:$0xff] %vm257, %v2519
      %2536 = vst.msk [vmem:[%s231 + $0x8] sm:$0xff] %vm257, %v2520
      %2537 = vst.msk [vmem:[%s231 + $0x10] sm:$0xff] %vm257, %v2521
      %2538 = vst.msk [vmem:[%s231 + $0x18] sm:$0xff] %vm257, %v2522
      %2539 = vst.msk [vmem:[%s231 + $0x20] sm:$0xff] %vm257, %v2523
      %2540 = vst.msk [vmem:[%s231 + $0x28] sm:$0xff] %vm257, %v2524
      %2541 = vst.msk [vmem:[%s231 + $0x30] sm:$0xff] %vm257, %v2525
      %2542 = vst.msk [vmem:[%s231 + $0x38] sm:$0xff] %vm257, %v2526
      %2543 = vst.msk [vmem:[%s231 + $0x40] sm:$0xff] %vm257, %v2527
      %2544 = vst.msk [vmem:[%s231 + $0x48] sm:$0xff] %vm257, %v2528
      %2545 = vst.msk [vmem:[%s231 + $0x50] sm:$0xff] %vm257, %v2529
      %2546 = vst.msk [vmem:[%s231 + $0x58] sm:$0xff] %vm257, %v2530
      %2547 = vst.msk [vmem:[%s231 + $0x60] sm:$0xff] %vm257, %v2531
      %2548 = vst.msk [vmem:[%s231 + $0x68] sm:$0xff] %vm257, %v2532
      %2549 = vst.msk [vmem:[%s231 + $0x70] sm:$0xff] %vm257, %v2533
      %2550 = vst.msk [vmem:[%s231 + $0x78] sm:$0xff] %vm257, %v2534
      %s2551 = smul.u32 2, %s16
      %p2552 = scmp.lt.s32.totalorder %s2551, 3
      %s2553 = scalar_select %p2552, %s2551, 3
      %s2554 = smul.addr %s2553, 8
      %s2555 = smul.addr %s2554, 8
      %s2556 = scalar_lea.vmem %s5, %s2555
      // Predicated region
      $region41: #{tpu_custom_call.1} parent=39 // pred_check
        %p2557 = pneg %p144
      $region42: #{tpu_custom_call.1} parent=39 // pred_check_branch
        %2559 = sbr.rel (%p2557) target = $region44
      $region43: #{tpu_custom_call.1} parent=39 // pred_region
        %s2560 = smul.u32 2, %s16
      $region44: #{tpu_custom_call.1} parent=39 // pred_fallthru
        _
    $region40: #{tpu_custom_call.1} parent=5 // pred_fallthru
      _
    %p2561 = scmp.le.s32.totalorder 2, %s11
    // Predicated region
    $region45: #{tpu_custom_call.1} parent=5 // pred_check
      %p2562 = pneg %p2561
    $region46: #{tpu_custom_call.1} parent=5 // pred_check_branch
      %2564 = sbr.rel (%p2562) target = $region48
    $region47: #{tpu_custom_call.1} parent=5 // pred_region
      %s2565 = ssub.s32 %s11, 2
      // Predicated region
      $region49: #{tpu_custom_call.1} parent=47 // pred_check
        %p2566 = pneg %p150
      $region50: #{tpu_custom_call.1} parent=47 // pred_check_branch
        %2568 = sbr.rel (%p2566) target = $region52
      $region51: #{tpu_custom_call.1} parent=47 // pred_region
        %s2569 = smul.u32 2, %s17
        %p2570 = scmp.lt.s32.totalorder %s2569, 3
        %s2571 = scalar_select %p2570, %s2569, 3
        %s2572 = smul.addr %s2571, 8
        %s2573 = smul.addr %s2572, 8
        %s2574 = scalar_lea.vmem %s5, %s2573
      $region52: #{tpu_custom_call.1} parent=47 // pred_fallthru
        _
    $region48: #{tpu_custom_call.1} parent=5 // pred_fallthru
      _
  $region6: #{tpu_custom_call.1} parent=0 // loop_footer
    %s15 = sadd.s32 1, %s11
  $region7: #{tpu_custom_call.1} parent=0 // loop_footer_branch
    %10 = sbr.rel target = $region3
  $region8: #{tpu_custom_call.1} parent=0 // loop_exit
    _

</llo_original>
